<compile_context>
chip_gen: v7x
topology: tpu7x:2x2x1
jax: 0.10.0
libtpu: 0.0.40
codegen_flags: <defaults>
</compile_context>

<pallas_src>
import numpy as np
import jax
import jax.numpy as jnp
from jax.experimental import pallas as pl
from jax.experimental.pallas import tpu as pltpu

# ------------------------- loss hyper-parameters -------------------------
MSE_W = 0.1
CORR_W = 0.1
TEMP_W = 0.1
SSIM_W = 0.35
ADV_W = 0.35
EPS = 1e-8
SSIM_C1 = 0.01 ** 2
SSIM_C2 = 0.03 ** 2
WINDOW_SIZE = 11
SIGMA = 1.5
HALF = WINDOW_SIZE // 2


def _gaussian_taps_np(size=WINDOW_SIZE, sigma=SIGMA):
    x = np.arange(size, dtype=np.float64)
    g = np.exp(-((x - size // 2) ** 2) / (2.0 * sigma ** 2))
    return (g / g.sum()).astype(np.float32)


_WINDOW_NP = _gaussian_taps_np()
_WINDOW_TAPS = [float(v) for v in _WINDOW_NP]   # baked into the kernel as immediates


def _softplus(x):
    # numerically stable softplus using only max/exp/log/abs (VPU/EUP friendly)
    return jnp.maximum(x, 0.0) + jnp.log(1.0 + jnp.exp(-jnp.abs(x)))


# ------------------------------ the kernel -------------------------------
def _make_kernel(B, C, L, TB):
    assert L > HALF, "signal length must exceed the conv half-window"
    assert C >= 2, "temporal-coherence loss needs at least 2 channels"
    assert B % TB == 0
    nsteps = B // TB

    def kernel(pred_ref, target_ref, real_ref, wd_ref, bd_ref, out_ref, acc_ref):
        step = pl.program_id(0)

        # ---- init scalar accumulators on the first grid step ----
        @pl.when(step == 0)
        def _init():
            for i in range(6):
                acc_ref[i] = jnp.float32(0.0)

        wd = wd_ref[...].astype(jnp.float32)     # (C, L) — resident (block idx const)
        bd = bd_ref[...].astype(jnp.float32)     # (1, 1)

        # ---- masked Gaussian taps as (1, L) lane vectors, hoisted once ----
        # Replaces per-tap vselect+vmul with a single broadcast vmul per shift.
        lane = jax.lax.broadcasted_iota(jnp.int32, (1, L), 1)
        wplus, wminus = [], []
        for o in range(1, HALF + 1):
            wplus.append(jnp.where(lane < L - o, _WINDOW_TAPS[HALF + o], 0.0))
            wminus.append(jnp.where(lane >= o, _WINDOW_TAPS[HALF - o], 0.0))

        def gconv(x):
            # depthwise Gaussian conv1d along L as 11 shifted multiply-adds
            acc = x * _WINDOW_TAPS[HALF]
            for o in range(1, HALF + 1):
                xp = pltpu.roll(x, L - o, axis=1)   # xp[i] = x[(i + o) mod L]
                xm = pltpu.roll(x, o, axis=1)       # xm[i] = x[(i - o) mod L]
                acc = acc + xp * wplus[o - 1] + xm * wminus[o - 1]
            return acc

        # ---- per-step partial sums kept in registers, folded into SMEM once ----
        mse_s = jnp.float32(0.0)
        corr_s = jnp.float32(0.0)
        temp_s = jnp.float32(0.0)
        ssim_s = jnp.float32(0.0)
        advr_s = jnp.float32(0.0)
        advf_s = jnp.float32(0.0)

        for bb in range(TB):   # TB <= 4, statically unrolled
            p = pred_ref[bb].astype(jnp.float32)    # (C, L)  (bf16 inputs upcast here)
            t = target_ref[bb].astype(jnp.float32)  # (C, L)
            r = real_ref[bb].astype(jnp.float32)    # (C, L)

            # ---------------- MSE (transpose-invariant) ----------------
            d = p - t
            mse_s = mse_s + jnp.sum(d * d)

            # ---- correlation: center / reduce over the channel axis (axis 0) ----
            pc = p - jnp.mean(p, axis=0, keepdims=True)
            tc = t - jnp.mean(t, axis=0, keepdims=True)
            pv = jnp.maximum(jnp.sum(pc * pc, axis=0, keepdims=True), EPS)   # (1, L)
            tv = jnp.maximum(jnp.sum(tc * tc, axis=0, keepdims=True), EPS)   # (1, L)
            s = jnp.sum(pc * tc, axis=0, keepdims=True)                      # (1, L)
            # EUP rsqrt; the torch "+EPS" on a denominator already clamped >= EPS
            # is numerically negligible and dropped here.
            cors = s * jax.lax.rsqrt(pv * tv)
            cors = jnp.clip(cors, -1.0 + EPS, 1.0 - EPS)
            corr_s = corr_s + jnp.sum(1.0 - cors)

            # ---- temporal coherence: channel diff of d (computed once) ----
            e = d[1:, :] - d[:-1, :]
            temp_s = temp_s + jnp.sum(e * e)

            # ---- SSIM: depthwise Gaussian conv1d along L ----
            mu1 = gconv(p)
            mu2 = gconv(t)
            e_pp = gconv(p * p)
            e_tt = gconv(t * t)
            e_pt = gconv(p * t)
            mu1s = mu1 * mu1
            mu2s = mu2 * mu2
            mu12 = mu1 * mu2
            s1 = e_pp - mu1s
            s2 = e_tt - mu2s
            s12 = e_pt - mu12
            ssim_map = ((2.0 * mu12 + SSIM_C1) * (2.0 * s12 + SSIM_C2)) / (
                (mu1s + mu2s + SSIM_C1) * (s1 + s2 + SSIM_C2))
            ssim_s = ssim_s + jnp.sum(1.0 - ssim_map)

            # ---- adversarial: linear discriminator + BCEWithLogits (per-batch) ----
            real_logit = jnp.sum(jnp.sum(r * wd, axis=1, keepdims=True),
                                 axis=0, keepdims=True) + bd          # (1, 1)
            fake_logit = jnp.sum(jnp.sum(p * wd, axis=1, keepdims=True),
                                 axis=0, keepdims=True) + bd          # (1, 1)
            advr_s = advr_s + jnp.sum(_softplus(-real_logit))   # BCE vs label 1
            advf_s = advf_s + jnp.sum(_softplus(fake_logit))    # BCE vs label 0

        # ---- accumulate raw sums (one SMEM RMW per loss per step) ----
        acc_ref[0] = acc_ref[0] + mse_s
        acc_ref[1] = acc_ref[1] + corr_s
        acc_ref[2] = acc_ref[2] + temp_s
        acc_ref[3] = acc_ref[3] + ssim_s
        acc_ref[4] = acc_ref[4] + advr_s
        acc_ref[5] = acc_ref[5] + advf_s

        # ---- finalize on the last grid step ----
        @pl.when(step == nsteps - 1)
        def _finalize():
            mse = acc_ref[0] * (1.0 / float(B * C * L))
            corr = acc_ref[1] * (1.0 / float(B * L))
            temporal = acc_ref[2] * (1.0 / float(B * (C - 1) * L))
            ssim = acc_ref[3] * (1.0 / float(B * C * L))
            adv = (acc_ref[4] + acc_ref[5]) * (1.0 / float(B))
            out_ref[0] = (MSE_W * mse + CORR_W * corr + TEMP_W * temporal
                          + SSIM_W * ssim + ADV_W * adv)
            out_ref[1] = mse
            out_ref[2] = corr
            out_ref[3] = temporal
            out_ref[4] = ssim
            out_ref[5] = adv

    return kernel


# ------------------------------ glue / wrapper ------------------------------
def _pick_batch_block(B, C, L, itemsize=4, vmem_budget=8 << 20, cap=4):
    """Largest divisor of B (<= cap) whose double-buffered streamed slabs fit."""
    per_batch = 3 * 2 * C * L * itemsize          # pred/target/real, 2 buffers each
    tb = int(max(1, min(cap, vmem_budget // max(per_batch, 1), B)))
    while B % tb:
        tb -= 1
    return tb


def neural_loss(pred, target, real_signal, disc_w, disc_b, batch_block=None):
    B, C, L = pred.shape
    TB = batch_block if batch_block is not None else _pick_batch_block(B, C, L)
    kernel = _make_kernel(B, C, L, TB)
    grid_spec = pltpu.PrefetchScalarGridSpec(
        num_scalar_prefetch=0,
        grid=(B // TB,),
        in_specs=[
            pl.BlockSpec((TB, C, L), lambda b: (b, 0, 0)),   # pred   (batch-tile slab)
            pl.BlockSpec((TB, C, L), lambda b: (b, 0, 0)),   # target
            pl.BlockSpec((TB, C, L), lambda b: (b, 0, 0)),   # real_signal
            pl.BlockSpec((C, L), lambda b: (0, 0)),          # disc weights (resident)
            pl.BlockSpec((1, 1), lambda b: (0, 0)),          # disc bias
        ],
        out_specs=pl.BlockSpec(memory_space=pltpu.MemorySpace.SMEM),
        scratch_shapes=[pltpu.SMEM((6,), jnp.float32)],
    )
    out = pl.pallas_call(
        kernel,
        out_shape=jax.ShapeDtypeStruct((6,), jnp.float32),
        grid_spec=grid_spec,
        compiler_params=pltpu.CompilerParams(
            # The single grid axis carries the scalar accumulation -> "arbitrary".
            dimension_semantics=("arbitrary",),
            vmem_limit_bytes=32 * 1024 * 1024,
        ),
    )(pred, target, real_signal, disc_w, disc_b)
    # out = [total, mse, corr, temporal, ssim, adv]
    return out


# ------------------------------ pure-JAX reference ------------------------------
def gaussian_window(size=WINDOW_SIZE, sigma=SIGMA):
    return jnp.asarray(_gaussian_taps_np(size, sigma))


def conv_band_matrix(L, window):
    """M[j, i] such that (x @ M)[i] == F.conv1d(x, window, padding=W//2)[i]."""
    W = window.shape[0]
    pad = W // 2
    j = jnp.arange(L)[:, None]          # input position
    i = jnp.arange(L)[None, :]          # output position
    k = j - i + pad
    valid = (k >= 0) & (k < W)
    return jnp.where(valid, window[jnp.clip(k, 0, W - 1)], 0.0).astype(jnp.float32)


def reference_loss(pred, target, real_signal, conv_mat, disc_w, disc_b):
    p, t, r = pred, target, real_signal
    B, C, L = p.shape
    mse = jnp.mean((p - t) ** 2)

    pc = p - jnp.mean(p, axis=1, keepdims=True)
    tc = t - jnp.mean(t, axis=1, keepdims=True)
    pv = jnp.maximum(jnp.sum(pc * pc, axis=1), EPS)
    tv = jnp.maximum(jnp.sum(tc * tc, axis=1), EPS)
    cors = jnp.sum(pc * tc, axis=1) / (jnp.sqrt(pv * tv) + EPS)
    cors = jnp.clip(cors, -1.0 + EPS, 1.0 - EPS)
    corr = jnp.mean(1.0 - cors)

    temporal = jnp.mean(((p[:, 1:, :] - p[:, :-1, :]) - (t[:, 1:, :] - t[:, :-1, :])) ** 2)

    mu1 = jnp.einsum('bcl,lm->bcm', p, conv_mat)
    mu2 = jnp.einsum('bcl,lm->bcm', t, conv_mat)
    e_pp = jnp.einsum('bcl,lm->bcm', p * p, conv_mat)
    e_tt = jnp.einsum('bcl,lm->bcm', t * t, conv_mat)
    e_pt = jnp.einsum('bcl,lm->bcm', p * t, conv_mat)
    mu1s, mu2s, mu12 = mu1 * mu1, mu2 * mu2, mu1 * mu2
    s1, s2, s12 = e_pp - mu1s, e_tt - mu2s, e_pt - mu12
    ssim_map = ((2 * mu12 + SSIM_C1) * (2 * s12 + SSIM_C2)) / (
        (mu1s + mu2s + SSIM_C1) * (s1 + s2 + SSIM_C2))
    ssim = jnp.mean(1.0 - ssim_map)

    real_logits = jnp.sum(r * disc_w[None], axis=(1, 2)) + disc_b[0, 0]
    fake_logits = jnp.sum(p * disc_w[None], axis=(1, 2)) + disc_b[0, 0]
    adv = jnp.mean(jax.nn.softplus(-real_logits)) + jnp.mean(jax.nn.softplus(fake_logits))

    total = MSE_W * mse + CORR_W * corr + TEMP_W * temporal + SSIM_W * ssim + ADV_W * adv
    return jnp.stack([total, mse, corr, temporal, ssim, adv])


if __name__ == "__main__":
    # Small demo shapes; L = 128 keeps the lane axis aligned to the vreg width.
    B, C, L = 2, 4, 128

    key = jax.random.PRNGKey(0)
    k1, k2, k3, k4 = jax.random.split(key, 4)
    pred = jax.random.normal(k1, (B, C, L), dtype=jnp.float32)
    target = jax.random.normal(k2, (B, C, L), dtype=jnp.float32)
    real_signal = jax.random.normal(k3, (B, C, L), dtype=jnp.float32)

    # deterministic synthetic discriminator parameters (linear: (C*L) -> 1 logit)
    disc_w = (jax.random.normal(k4, (C, L), dtype=jnp.float32) * 0.1)
    disc_b = jnp.zeros((1, 1), dtype=jnp.float32)

    out = jax.block_until_ready(neural_loss(pred, target, real_signal, disc_w, disc_b))

    window = gaussian_window(WINDOW_SIZE)
    conv_mat = conv_band_matrix(L, window)
    ref = jax.block_until_ready(
        reference_loss(pred, target, real_signal, conv_mat, disc_w, disc_b))
    np.testing.assert_allclose(np.asarray(out), np.asarray(ref), rtol=1e-3, atol=1e-4)

    print("KERNEL_OK")
</pallas_src>

<mosaic_0001>
module attributes {stable_mosaic.version = 11 : i64} {
  func.func @kernel(%arg0: i32, %arg1: memref<2x4x128xf32, #tpu.memory_space<vmem>>, %arg2: memref<2x4x128xf32, #tpu.memory_space<vmem>>, %arg3: memref<2x4x128xf32, #tpu.memory_space<vmem>>, %arg4: memref<4x128xf32, #tpu.memory_space<vmem>>, %arg5: memref<1x1xf32, #tpu.memory_space<vmem>>, %arg6: memref<6xf32, #tpu.memory_space<smem>>, %arg7: memref<6xf32, #tpu.memory_space<smem>>) attributes {dimension_semantics = [#tpu.dimension_semantics<arbitrary>], iteration_bounds = array<i64: 1>, scalar_prefetch = 0 : i64, scratch_operands = 1 : i64, tpu.core_type = #tpu.core_type<tc>, window_params = [{transform_indices = @transform_0, window_bounds = array<i64: 2, 4, 128>}, {transform_indices = @transform_1, window_bounds = array<i64: 2, 4, 128>}, {transform_indices = @transform_2, window_bounds = array<i64: 2, 4, 128>}, {pipeline_mode = #tpu.pipeline_mode<synchronous>, transform_indices = @transform_3, window_bounds = array<i64: 4, 128>}, {pipeline_mode = #tpu.pipeline_mode<synchronous>, transform_indices = @transform_4, window_bounds = array<i64: 1, 1>}, {transform_indices = @transform_5, window_bounds = array<i64: 6>}]} {
    %c0_i32 = arith.constant 0 : i32
    %0 = arith.cmpi eq, %arg0, %c0_i32 : i32
    %1 = arith.extui %0 : i1 to i32
    %c0_i32_0 = arith.constant 0 : i32
    %2 = arith.cmpi ne, %1, %c0_i32_0 : i32
    scf.if %2 {
      %cst_238 = arith.constant 0.000000e+00 : f32
      %c0_239 = arith.constant 0 : index
      %773 = memref.load %arg7[%c0_239] : memref<6xf32, #tpu.memory_space<smem>>
      memref.store %cst_238, %arg7[%c0_239] : memref<6xf32, #tpu.memory_space<smem>>
      %cst_240 = arith.constant 0.000000e+00 : f32
      %c1_241 = arith.constant 1 : index
      %774 = memref.load %arg7[%c1_241] : memref<6xf32, #tpu.memory_space<smem>>
      memref.store %cst_240, %arg7[%c1_241] : memref<6xf32, #tpu.memory_space<smem>>
      %cst_242 = arith.constant 0.000000e+00 : f32
      %c2_243 = arith.constant 2 : index
      %775 = memref.load %arg7[%c2_243] : memref<6xf32, #tpu.memory_space<smem>>
      memref.store %cst_242, %arg7[%c2_243] : memref<6xf32, #tpu.memory_space<smem>>
      %cst_244 = arith.constant 0.000000e+00 : f32
      %c3_245 = arith.constant 3 : index
      %776 = memref.load %arg7[%c3_245] : memref<6xf32, #tpu.memory_space<smem>>
      memref.store %cst_244, %arg7[%c3_245] : memref<6xf32, #tpu.memory_space<smem>>
      %cst_246 = arith.constant 0.000000e+00 : f32
      %c4_247 = arith.constant 4 : index
      %777 = memref.load %arg7[%c4_247] : memref<6xf32, #tpu.memory_space<smem>>
      memref.store %cst_246, %arg7[%c4_247] : memref<6xf32, #tpu.memory_space<smem>>
      %cst_248 = arith.constant 0.000000e+00 : f32
      %c5_249 = arith.constant 5 : index
      %778 = memref.load %arg7[%c5_249] : memref<6xf32, #tpu.memory_space<smem>>
      memref.store %cst_248, %arg7[%c5_249] : memref<6xf32, #tpu.memory_space<smem>>
    } else {
    }
    %c0 = arith.constant 0 : index
    %c0_1 = arith.constant 0 : index
    %3 = vector.load %arg4[%c0, %c0_1] : memref<4x128xf32, #tpu.memory_space<vmem>>, vector<4x128xf32>
    %c0_2 = arith.constant 0 : index
    %c0_3 = arith.constant 0 : index
    %4 = vector.load %arg5[%c0_2, %c0_3] : memref<1x1xf32, #tpu.memory_space<vmem>>, vector<1x1xf32>
    %5 = tpu.iota {dimensions = array<i32: 1>} : vector<1x128xi32>
    %c127_i32 = arith.constant 127 : i32
    %6 = vector.broadcast %c127_i32 : i32 to vector<1x128xi32>
    %7 = arith.cmpi slt, %5, %6 : vector<1x128xi32>
    %cst = arith.constant 0.213005543 : f32
    %cst_4 = arith.constant 0.000000e+00 : f32
    %8 = vector.broadcast %cst : f32 to vector<1x128xf32>
    %9 = vector.broadcast %cst_4 : f32 to vector<1x128xf32>
    %10 = arith.select %7, %8, %9 : vector<1x128xi1>, vector<1x128xf32>
    %c1_i32 = arith.constant 1 : i32
    %11 = vector.broadcast %c1_i32 : i32 to vector<1x128xi32>
    %12 = arith.cmpi sge, %5, %11 : vector<1x128xi32>
    %cst_5 = arith.constant 0.213005543 : f32
    %cst_6 = arith.constant 0.000000e+00 : f32
    %13 = vector.broadcast %cst_5 : f32 to vector<1x128xf32>
    %14 = vector.broadcast %cst_6 : f32 to vector<1x128xf32>
    %15 = arith.select %12, %13, %14 : vector<1x128xi1>, vector<1x128xf32>
    %c126_i32 = arith.constant 126 : i32
    %16 = vector.broadcast %c126_i32 : i32 to vector<1x128xi32>
    %17 = arith.cmpi slt, %5, %16 : vector<1x128xi32>
    %cst_7 = arith.constant 0.109360687 : f32
    %cst_8 = arith.constant 0.000000e+00 : f32
    %18 = vector.broadcast %cst_7 : f32 to vector<1x128xf32>
    %19 = vector.broadcast %cst_8 : f32 to vector<1x128xf32>
    %20 = arith.select %17, %18, %19 : vector<1x128xi1>, vector<1x128xf32>
    %c2_i32 = arith.constant 2 : i32
    %21 = vector.broadcast %c2_i32 : i32 to vector<1x128xi32>
    %22 = arith.cmpi sge, %5, %21 : vector<1x128xi32>
    %cst_9 = arith.constant 0.109360687 : f32
    %cst_10 = arith.constant 0.000000e+00 : f32
    %23 = vector.broadcast %cst_9 : f32 to vector<1x128xf32>
    %24 = vector.broadcast %cst_10 : f32 to vector<1x128xf32>
    %25 = arith.select %22, %23, %24 : vector<1x128xi1>, vector<1x128xf32>
    %c125_i32 = arith.constant 125 : i32
    %26 = vector.broadcast %c125_i32 : i32 to vector<1x128xi32>
    %27 = arith.cmpi slt, %5, %26 : vector<1x128xi32>
    %cst_11 = arith.constant 0.0360007733 : f32
    %cst_12 = arith.constant 0.000000e+00 : f32
    %28 = vector.broadcast %cst_11 : f32 to vector<1x128xf32>
    %29 = vector.broadcast %cst_12 : f32 to vector<1x128xf32>
    %30 = arith.select %27, %28, %29 : vector<1x128xi1>, vector<1x128xf32>
    %c3_i32 = arith.constant 3 : i32
    %31 = vector.broadcast %c3_i32 : i32 to vector<1x128xi32>
    %32 = arith.cmpi sge, %5, %31 : vector<1x128xi32>
    %cst_13 = arith.constant 0.0360007733 : f32
    %cst_14 = arith.constant 0.000000e+00 : f32
    %33 = vector.broadcast %cst_13 : f32 to vector<1x128xf32>
    %34 = vector.broadcast %cst_14 : f32 to vector<1x128xf32>
    %35 = arith.select %32, %33, %34 : vector<1x128xi1>, vector<1x128xf32>
    %c124_i32 = arith.constant 124 : i32
    %36 = vector.broadcast %c124_i32 : i32 to vector<1x128xi32>
    %37 = arith.cmpi slt, %5, %36 : vector<1x128xi32>
    %cst_15 = arith.constant 0.00759875821 : f32
    %cst_16 = arith.constant 0.000000e+00 : f32
    %38 = vector.broadcast %cst_15 : f32 to vector<1x128xf32>
    %39 = vector.broadcast %cst_16 : f32 to vector<1x128xf32>
    %40 = arith.select %37, %38, %39 : vector<1x128xi1>, vector<1x128xf32>
    %c4_i32 = arith.constant 4 : i32
    %41 = vector.broadcast %c4_i32 : i32 to vector<1x128xi32>
    %42 = arith.cmpi sge, %5, %41 : vector<1x128xi32>
    %cst_17 = arith.constant 0.00759875821 : f32
    %cst_18 = arith.constant 0.000000e+00 : f32
    %43 = vector.broadcast %cst_17 : f32 to vector<1x128xf32>
    %44 = vector.broadcast %cst_18 : f32 to vector<1x128xf32>
    %45 = arith.select %42, %43, %44 : vector<1x128xi1>, vector<1x128xf32>
    %c123_i32 = arith.constant 123 : i32
    %46 = vector.broadcast %c123_i32 : i32 to vector<1x128xi32>
    %47 = arith.cmpi slt, %5, %46 : vector<1x128xi32>
    %cst_19 = arith.constant 0.00102838012 : f32
    %cst_20 = arith.constant 0.000000e+00 : f32
    %48 = vector.broadcast %cst_19 : f32 to vector<1x128xf32>
    %49 = vector.broadcast %cst_20 : f32 to vector<1x128xf32>
    %50 = arith.select %47, %48, %49 : vector<1x128xi1>, vector<1x128xf32>
    %c5_i32 = arith.constant 5 : i32
    %51 = vector.broadcast %c5_i32 : i32 to vector<1x128xi32>
    %52 = arith.cmpi sge, %5, %51 : vector<1x128xi32>
    %cst_21 = arith.constant 0.00102838012 : f32
    %cst_22 = arith.constant 0.000000e+00 : f32
    %53 = vector.broadcast %cst_21 : f32 to vector<1x128xf32>
    %54 = vector.broadcast %cst_22 : f32 to vector<1x128xf32>
    %55 = arith.select %52, %53, %54 : vector<1x128xi1>, vector<1x128xf32>
    %c0_23 = arith.constant 0 : index
    %c0_24 = arith.constant 0 : index
    %c0_25 = arith.constant 0 : index
    %56 = vector.load %arg1[%c0_23, %c0_24, %c0_25] : memref<2x4x128xf32, #tpu.memory_space<vmem>>, vector<1x4x128xf32>
    %57 = vector.shape_cast %56 : vector<1x4x128xf32> to vector<4x128xf32>
    %c0_26 = arith.constant 0 : index
    %c0_27 = arith.constant 0 : index
    %c0_28 = arith.constant 0 : index
    %58 = vector.load %arg2[%c0_26, %c0_27, %c0_28] : memref<2x4x128xf32, #tpu.memory_space<vmem>>, vector<1x4x128xf32>
    %59 = vector.shape_cast %58 : vector<1x4x128xf32> to vector<4x128xf32>
    %c0_29 = arith.constant 0 : index
    %c0_30 = arith.constant 0 : index
    %c0_31 = arith.constant 0 : index
    %60 = vector.load %arg3[%c0_29, %c0_30, %c0_31] : memref<2x4x128xf32, #tpu.memory_space<vmem>>, vector<1x4x128xf32>
    %61 = vector.shape_cast %60 : vector<1x4x128xf32> to vector<4x128xf32>
    %62 = arith.subf %57, %59 : vector<4x128xf32>
    %63 = arith.mulf %62, %62 : vector<4x128xf32>
    %64 = vector.shape_cast %63 : vector<4x128xf32> to vector<1x4x128xf32>
    %cst_32 = arith.constant dense<0.000000e+00> : vector<1xf32>
    %65 = vector.multi_reduction <add>, %64, %cst_32 [1, 2] : vector<1x4x128xf32> to vector<1xf32>
    %66 = vector.shape_cast %65 : vector<1xf32> to vector<1x1x1xf32>
    %67 = vector.extract %66[0, 0, 0] : f32 from vector<1x1x1xf32>
    %cst_33 = arith.constant 0.000000e+00 : f32
    %68 = arith.addf %cst_33, %67 : f32
    %cst_34 = arith.constant dense<0.000000e+00> : vector<128xf32>
    %69 = vector.multi_reduction <add>, %57, %cst_34 [0] : vector<4x128xf32> to vector<128xf32>
    %70 = vector.shape_cast %69 : vector<128xf32> to vector<1x128xf32>
    %cst_35 = arith.constant 4.000000e+00 : f32
    %71 = vector.broadcast %cst_35 : f32 to vector<1x128xf32>
    %72 = arith.divf %70, %71 : vector<1x128xf32>
    %73 = vector.broadcast %72 : vector<1x128xf32> to vector<4x128xf32>
    %74 = arith.subf %57, %73 : vector<4x128xf32>
    %cst_36 = arith.constant dense<0.000000e+00> : vector<128xf32>
    %75 = vector.multi_reduction <add>, %59, %cst_36 [0] : vector<4x128xf32> to vector<128xf32>
    %76 = vector.shape_cast %75 : vector<128xf32> to vector<1x128xf32>
    %cst_37 = arith.constant 4.000000e+00 : f32
    %77 = vector.broadcast %cst_37 : f32 to vector<1x128xf32>
    %78 = arith.divf %76, %77 : vector<1x128xf32>
    %79 = vector.broadcast %78 : vector<1x128xf32> to vector<4x128xf32>
    %80 = arith.subf %59, %79 : vector<4x128xf32>
    %81 = arith.mulf %74, %74 : vector<4x128xf32>
    %cst_38 = arith.constant dense<0.000000e+00> : vector<128xf32>
    %82 = vector.multi_reduction <add>, %81, %cst_38 [0] : vector<4x128xf32> to vector<128xf32>
    %83 = vector.shape_cast %82 : vector<128xf32> to vector<1x128xf32>
    %cst_39 = arith.constant 9.99999993E-9 : f32
    %84 = vector.broadcast %cst_39 : f32 to vector<1x128xf32>
    %85 = arith.maximumf %83, %84 : vector<1x128xf32>
    %86 = arith.mulf %80, %80 : vector<4x128xf32>
    %cst_40 = arith.constant dense<0.000000e+00> : vector<128xf32>
    %87 = vector.multi_reduction <add>, %86, %cst_40 [0] : vector<4x128xf32> to vector<128xf32>
    %88 = vector.shape_cast %87 : vector<128xf32> to vector<1x128xf32>
    %cst_41 = arith.constant 9.99999993E-9 : f32
    %89 = vector.broadcast %cst_41 : f32 to vector<1x128xf32>
    %90 = arith.maximumf %88, %89 : vector<1x128xf32>
    %91 = arith.mulf %74, %80 : vector<4x128xf32>
    %cst_42 = arith.constant dense<0.000000e+00> : vector<128xf32>
    %92 = vector.multi_reduction <add>, %91, %cst_42 [0] : vector<4x128xf32> to vector<128xf32>
    %93 = vector.shape_cast %92 : vector<128xf32> to vector<1x128xf32>
    %94 = arith.mulf %85, %90 : vector<1x128xf32>
    %95 = math.rsqrt %94 : vector<1x128xf32>
    %96 = arith.mulf %93, %95 : vector<1x128xf32>
    %cst_43 = arith.constant -1.000000e+00 : f32
    %cst_44 = arith.constant 1.000000e+00 : f32
    %97 = vector.broadcast %cst_43 : f32 to vector<1x128xf32>
    %98 = arith.maximumf %97, %96 : vector<1x128xf32>
    %99 = vector.broadcast %cst_44 : f32 to vector<1x128xf32>
    %100 = arith.minimumf %99, %98 : vector<1x128xf32>
    %cst_45 = arith.constant 1.000000e+00 : f32
    %101 = vector.broadcast %cst_45 : f32 to vector<1x128xf32>
    %102 = arith.subf %101, %100 : vector<1x128xf32>
    %103 = vector.shape_cast %102 : vector<1x128xf32> to vector<1x1x128xf32>
    %cst_46 = arith.constant dense<0.000000e+00> : vector<1xf32>
    %104 = vector.multi_reduction <add>, %103, %cst_46 [1, 2] : vector<1x1x128xf32> to vector<1xf32>
    %105 = vector.shape_cast %104 : vector<1xf32> to vector<1x1x1xf32>
    %106 = vector.extract %105[0, 0, 0] : f32 from vector<1x1x1xf32>
    %cst_47 = arith.constant 0.000000e+00 : f32
    %107 = arith.addf %cst_47, %106 : f32
    %108 = vector.extract_strided_slice %62 {offsets = [1, 0], sizes = [3, 128], strides = [1, 1]} : vector<4x128xf32> to vector<3x128xf32>
    %109 = vector.extract_strided_slice %62 {offsets = [0, 0], sizes = [3, 128], strides = [1, 1]} : vector<4x128xf32> to vector<3x128xf32>
    %110 = arith.subf %108, %109 : vector<3x128xf32>
    %111 = arith.mulf %110, %110 : vector<3x128xf32>
    %112 = vector.shape_cast %111 : vector<3x128xf32> to vector<1x3x128xf32>
    %cst_48 = arith.constant dense<0.000000e+00> : vector<1xf32>
    %113 = vector.multi_reduction <add>, %112, %cst_48 [1, 2] : vector<1x3x128xf32> to vector<1xf32>
    %114 = vector.shape_cast %113 : vector<1xf32> to vector<1x1x1xf32>
    %115 = vector.extract %114[0, 0, 0] : f32 from vector<1x1x1xf32>
    %cst_49 = arith.constant 0.000000e+00 : f32
    %116 = arith.addf %cst_49, %115 : f32
    %cst_50 = arith.constant 0.266011715 : f32
    %117 = vector.broadcast %cst_50 : f32 to vector<4x128xf32>
    %118 = arith.mulf %57, %117 : vector<4x128xf32>
    %c127_i32_51 = arith.constant 127 : i32
    %119 = tpu.dynamic_rotate %57 by %c127_i32_51 dim 1 : vector<4x128xf32>, i32 -> vector<4x128xf32>
    %c1_i32_52 = arith.constant 1 : i32
    %120 = tpu.dynamic_rotate %57 by %c1_i32_52 dim 1 : vector<4x128xf32>, i32 -> vector<4x128xf32>
    %121 = vector.broadcast %10 : vector<1x128xf32> to vector<4x128xf32>
    %122 = arith.mulf %119, %121 : vector<4x128xf32>
    %123 = arith.addf %118, %122 : vector<4x128xf32>
    %124 = vector.broadcast %15 : vector<1x128xf32> to vector<4x128xf32>
    %125 = arith.mulf %120, %124 : vector<4x128xf32>
    %126 = arith.addf %123, %125 : vector<4x128xf32>
    %c126_i32_53 = arith.constant 126 : i32
    %127 = tpu.dynamic_rotate %57 by %c126_i32_53 dim 1 : vector<4x128xf32>, i32 -> vector<4x128xf32>
    %c2_i32_54 = arith.constant 2 : i32
    %128 = tpu.dynamic_rotate %57 by %c2_i32_54 dim 1 : vector<4x128xf32>, i32 -> vector<4x128xf32>
    %129 = vector.broadcast %20 : vector<1x128xf32> to vector<4x128xf32>
    %130 = arith.mulf %127, %129 : vector<4x128xf32>
    %131 = arith.addf %126, %130 : vector<4x128xf32>
    %132 = vector.broadcast %25 : vector<1x128xf32> to vector<4x128xf32>
    %133 = arith.mulf %128, %132 : vector<4x128xf32>
    %134 = arith.addf %131, %133 : vector<4x128xf32>
    %c125_i32_55 = arith.constant 125 : i32
    %135 = tpu.dynamic_rotate %57 by %c125_i32_55 dim 1 : vector<4x128xf32>, i32 -> vector<4x128xf32>
    %c3_i32_56 = arith.constant 3 : i32
    %136 = tpu.dynamic_rotate %57 by %c3_i32_56 dim 1 : vector<4x128xf32>, i32 -> vector<4x128xf32>
    %137 = vector.broadcast %30 : vector<1x128xf32> to vector<4x128xf32>
    %138 = arith.mulf %135, %137 : vector<4x128xf32>
    %139 = arith.addf %134, %138 : vector<4x128xf32>
    %140 = vector.broadcast %35 : vector<1x128xf32> to vector<4x128xf32>
    %141 = arith.mulf %136, %140 : vector<4x128xf32>
    %142 = arith.addf %139, %141 : vector<4x128xf32>
    %c124_i32_57 = arith.constant 124 : i32
    %143 = tpu.dynamic_rotate %57 by %c124_i32_57 dim 1 : vector<4x128xf32>, i32 -> vector<4x128xf32>
    %c4_i32_58 = arith.constant 4 : i32
    %144 = tpu.dynamic_rotate %57 by %c4_i32_58 dim 1 : vector<4x128xf32>, i32 -> vector<4x128xf32>
    %145 = vector.broadcast %40 : vector<1x128xf32> to vector<4x128xf32>
    %146 = arith.mulf %143, %145 : vector<4x128xf32>
    %147 = arith.addf %142, %146 : vector<4x128xf32>
    %148 = vector.broadcast %45 : vector<1x128xf32> to vector<4x128xf32>
    %149 = arith.mulf %144, %148 : vector<4x128xf32>
    %150 = arith.addf %147, %149 : vector<4x128xf32>
    %c123_i32_59 = arith.constant 123 : i32
    %151 = tpu.dynamic_rotate %57 by %c123_i32_59 dim 1 : vector<4x128xf32>, i32 -> vector<4x128xf32>
    %c5_i32_60 = arith.constant 5 : i32
    %152 = tpu.dynamic_rotate %57 by %c5_i32_60 dim 1 : vector<4x128xf32>, i32 -> vector<4x128xf32>
    %153 = vector.broadcast %50 : vector<1x128xf32> to vector<4x128xf32>
    %154 = arith.mulf %151, %153 : vector<4x128xf32>
    %155 = arith.addf %150, %154 : vector<4x128xf32>
    %156 = vector.broadcast %55 : vector<1x128xf32> to vector<4x128xf32>
    %157 = arith.mulf %152, %156 : vector<4x128xf32>
    %158 = arith.addf %155, %157 : vector<4x128xf32>
    %cst_61 = arith.constant 0.266011715 : f32
    %159 = vector.broadcast %cst_61 : f32 to vector<4x128xf32>
    %160 = arith.mulf %59, %159 : vector<4x128xf32>
    %c127_i32_62 = arith.constant 127 : i32
    %161 = tpu.dynamic_rotate %59 by %c127_i32_62 dim 1 : vector<4x128xf32>, i32 -> vector<4x128xf32>
    %c1_i32_63 = arith.constant 1 : i32
    %162 = tpu.dynamic_rotate %59 by %c1_i32_63 dim 1 : vector<4x128xf32>, i32 -> vector<4x128xf32>
    %163 = vector.broadcast %10 : vector<1x128xf32> to vector<4x128xf32>
    %164 = arith.mulf %161, %163 : vector<4x128xf32>
    %165 = arith.addf %160, %164 : vector<4x128xf32>
    %166 = vector.broadcast %15 : vector<1x128xf32> to vector<4x128xf32>
    %167 = arith.mulf %162, %166 : vector<4x128xf32>
    %168 = arith.addf %165, %167 : vector<4x128xf32>
    %c126_i32_64 = arith.constant 126 : i32
    %169 = tpu.dynamic_rotate %59 by %c126_i32_64 dim 1 : vector<4x128xf32>, i32 -> vector<4x128xf32>
    %c2_i32_65 = arith.constant 2 : i32
    %170 = tpu.dynamic_rotate %59 by %c2_i32_65 dim 1 : vector<4x128xf32>, i32 -> vector<4x128xf32>
    %171 = vector.broadcast %20 : vector<1x128xf32> to vector<4x128xf32>
    %172 = arith.mulf %169, %171 : vector<4x128xf32>
    %173 = arith.addf %168, %172 : vector<4x128xf32>
    %174 = vector.broadcast %25 : vector<1x128xf32> to vector<4x128xf32>
    %175 = arith.mulf %170, %174 : vector<4x128xf32>
    %176 = arith.addf %173, %175 : vector<4x128xf32>
    %c125_i32_66 = arith.constant 125 : i32
    %177 = tpu.dynamic_rotate %59 by %c125_i32_66 dim 1 : vector<4x128xf32>, i32 -> vector<4x128xf32>
    %c3_i32_67 = arith.constant 3 : i32
    %178 = tpu.dynamic_rotate %59 by %c3_i32_67 dim 1 : vector<4x128xf32>, i32 -> vector<4x128xf32>
    %179 = vector.broadcast %30 : vector<1x128xf32> to vector<4x128xf32>
    %180 = arith.mulf %177, %179 : vector<4x128xf32>
    %181 = arith.addf %176, %180 : vector<4x128xf32>
    %182 = vector.broadcast %35 : vector<1x128xf32> to vector<4x128xf32>
    %183 = arith.mulf %178, %182 : vector<4x128xf32>
    %184 = arith.addf %181, %183 : vector<4x128xf32>
    %c124_i32_68 = arith.constant 124 : i32
    %185 = tpu.dynamic_rotate %59 by %c124_i32_68 dim 1 : vector<4x128xf32>, i32 -> vector<4x128xf32>
    %c4_i32_69 = arith.constant 4 : i32
    %186 = tpu.dynamic_rotate %59 by %c4_i32_69 dim 1 : vector<4x128xf32>, i32 -> vector<4x128xf32>
    %187 = vector.broadcast %40 : vector<1x128xf32> to vector<4x128xf32>
    %188 = arith.mulf %185, %187 : vector<4x128xf32>
    %189 = arith.addf %184, %188 : vector<4x128xf32>
    %190 = vector.broadcast %45 : vector<1x128xf32> to vector<4x128xf32>
    %191 = arith.mulf %186, %190 : vector<4x128xf32>
    %192 = arith.addf %189, %191 : vector<4x128xf32>
    %c123_i32_70 = arith.constant 123 : i32
    %193 = tpu.dynamic_rotate %59 by %c123_i32_70 dim 1 : vector<4x128xf32>, i32 -> vector<4x128xf32>
    %c5_i32_71 = arith.constant 5 : i32
    %194 = tpu.dynamic_rotate %59 by %c5_i32_71 dim 1 : vector<4x128xf32>, i32 -> vector<4x128xf32>
    %195 = vector.broadcast %50 : vector<1x128xf32> to vector<4x128xf32>
    %196 = arith.mulf %193, %195 : vector<4x128xf32>
    %197 = arith.addf %192, %196 : vector<4x128xf32>
    %198 = vector.broadcast %55 : vector<1x128xf32> to vector<4x128xf32>
    %199 = arith.mulf %194, %198 : vector<4x128xf32>
    %200 = arith.addf %197, %199 : vector<4x128xf32>
    %201 = arith.mulf %57, %57 : vector<4x128xf32>
    %cst_72 = arith.constant 0.266011715 : f32
    %202 = vector.broadcast %cst_72 : f32 to vector<4x128xf32>
    %203 = arith.mulf %201, %202 : vector<4x128xf32>
    %c127_i32_73 = arith.constant 127 : i32
    %204 = tpu.dynamic_rotate %201 by %c127_i32_73 dim 1 : vector<4x128xf32>, i32 -> vector<4x128xf32>
    %c1_i32_74 = arith.constant 1 : i32
    %205 = tpu.dynamic_rotate %201 by %c1_i32_74 dim 1 : vector<4x128xf32>, i32 -> vector<4x128xf32>
    %206 = vector.broadcast %10 : vector<1x128xf32> to vector<4x128xf32>
    %207 = arith.mulf %204, %206 : vector<4x128xf32>
    %208 = arith.addf %203, %207 : vector<4x128xf32>
    %209 = vector.broadcast %15 : vector<1x128xf32> to vector<4x128xf32>
    %210 = arith.mulf %205, %209 : vector<4x128xf32>
    %211 = arith.addf %208, %210 : vector<4x128xf32>
    %c126_i32_75 = arith.constant 126 : i32
    %212 = tpu.dynamic_rotate %201 by %c126_i32_75 dim 1 : vector<4x128xf32>, i32 -> vector<4x128xf32>
    %c2_i32_76 = arith.constant 2 : i32
    %213 = tpu.dynamic_rotate %201 by %c2_i32_76 dim 1 : vector<4x128xf32>, i32 -> vector<4x128xf32>
    %214 = vector.broadcast %20 : vector<1x128xf32> to vector<4x128xf32>
    %215 = arith.mulf %212, %214 : vector<4x128xf32>
    %216 = arith.addf %211, %215 : vector<4x128xf32>
    %217 = vector.broadcast %25 : vector<1x128xf32> to vector<4x128xf32>
    %218 = arith.mulf %213, %217 : vector<4x128xf32>
    %219 = arith.addf %216, %218 : vector<4x128xf32>
    %c125_i32_77 = arith.constant 125 : i32
    %220 = tpu.dynamic_rotate %201 by %c125_i32_77 dim 1 : vector<4x128xf32>, i32 -> vector<4x128xf32>
    %c3_i32_78 = arith.constant 3 : i32
    %221 = tpu.dynamic_rotate %201 by %c3_i32_78 dim 1 : vector<4x128xf32>, i32 -> vector<4x128xf32>
    %222 = vector.broadcast %30 : vector<1x128xf32> to vector<4x128xf32>
    %223 = arith.mulf %220, %222 : vector<4x128xf32>
    %224 = arith.addf %219, %223 : vector<4x128xf32>
    %225 = vector.broadcast %35 : vector<1x128xf32> to vector<4x128xf32>
    %226 = arith.mulf %221, %225 : vector<4x128xf32>
    %227 = arith.addf %224, %226 : vector<4x128xf32>
    %c124_i32_79 = arith.constant 124 : i32
    %228 = tpu.dynamic_rotate %201 by %c124_i32_79 dim 1 : vector<4x128xf32>, i32 -> vector<4x128xf32>
    %c4_i32_80 = arith.constant 4 : i32
    %229 = tpu.dynamic_rotate %201 by %c4_i32_80 dim 1 : vector<4x128xf32>, i32 -> vector<4x128xf32>
    %230 = vector.broadcast %40 : vector<1x128xf32> to vector<4x128xf32>
    %231 = arith.mulf %228, %230 : vector<4x128xf32>
    %232 = arith.addf %227, %231 : vector<4x128xf32>
    %233 = vector.broadcast %45 : vector<1x128xf32> to vector<4x128xf32>
    %234 = arith.mulf %229, %233 : vector<4x128xf32>
    %235 = arith.addf %232, %234 : vector<4x128xf32>
    %c123_i32_81 = arith.constant 123 : i32
    %236 = tpu.dynamic_rotate %201 by %c123_i32_81 dim 1 : vector<4x128xf32>, i32 -> vector<4x128xf32>
    %c5_i32_82 = arith.constant 5 : i32
    %237 = tpu.dynamic_rotate %201 by %c5_i32_82 dim 1 : vector<4x128xf32>, i32 -> vector<4x128xf32>
    %238 = vector.broadcast %50 : vector<1x128xf32> to vector<4x128xf32>
    %239 = arith.mulf %236, %238 : vector<4x128xf32>
    %240 = arith.addf %235, %239 : vector<4x128xf32>
    %241 = vector.broadcast %55 : vector<1x128xf32> to vector<4x128xf32>
    %242 = arith.mulf %237, %241 : vector<4x128xf32>
    %243 = arith.addf %240, %242 : vector<4x128xf32>
    %244 = arith.mulf %59, %59 : vector<4x128xf32>
    %cst_83 = arith.constant 0.266011715 : f32
    %245 = vector.broadcast %cst_83 : f32 to vector<4x128xf32>
    %246 = arith.mulf %244, %245 : vector<4x128xf32>
    %c127_i32_84 = arith.constant 127 : i32
    %247 = tpu.dynamic_rotate %244 by %c127_i32_84 dim 1 : vector<4x128xf32>, i32 -> vector<4x128xf32>
    %c1_i32_85 = arith.constant 1 : i32
    %248 = tpu.dynamic_rotate %244 by %c1_i32_85 dim 1 : vector<4x128xf32>, i32 -> vector<4x128xf32>
    %249 = vector.broadcast %10 : vector<1x128xf32> to vector<4x128xf32>
    %250 = arith.mulf %247, %249 : vector<4x128xf32>
    %251 = arith.addf %246, %250 : vector<4x128xf32>
    %252 = vector.broadcast %15 : vector<1x128xf32> to vector<4x128xf32>
    %253 = arith.mulf %248, %252 : vector<4x128xf32>
    %254 = arith.addf %251, %253 : vector<4x128xf32>
    %c126_i32_86 = arith.constant 126 : i32
    %255 = tpu.dynamic_rotate %244 by %c126_i32_86 dim 1 : vector<4x128xf32>, i32 -> vector<4x128xf32>
    %c2_i32_87 = arith.constant 2 : i32
    %256 = tpu.dynamic_rotate %244 by %c2_i32_87 dim 1 : vector<4x128xf32>, i32 -> vector<4x128xf32>
    %257 = vector.broadcast %20 : vector<1x128xf32> to vector<4x128xf32>
    %258 = arith.mulf %255, %257 : vector<4x128xf32>
    %259 = arith.addf %254, %258 : vector<4x128xf32>
    %260 = vector.broadcast %25 : vector<1x128xf32> to vector<4x128xf32>
    %261 = arith.mulf %256, %260 : vector<4x128xf32>
    %262 = arith.addf %259, %261 : vector<4x128xf32>
    %c125_i32_88 = arith.constant 125 : i32
    %263 = tpu.dynamic_rotate %244 by %c125_i32_88 dim 1 : vector<4x128xf32>, i32 -> vector<4x128xf32>
    %c3_i32_89 = arith.constant 3 : i32
    %264 = tpu.dynamic_rotate %244 by %c3_i32_89 dim 1 : vector<4x128xf32>, i32 -> vector<4x128xf32>
    %265 = vector.broadcast %30 : vector<1x128xf32> to vector<4x128xf32>
    %266 = arith.mulf %263, %265 : vector<4x128xf32>
    %267 = arith.addf %262, %266 : vector<4x128xf32>
    %268 = vector.broadcast %35 : vector<1x128xf32> to vector<4x128xf32>
    %269 = arith.mulf %264, %268 : vector<4x128xf32>
    %270 = arith.addf %267, %269 : vector<4x128xf32>
    %c124_i32_90 = arith.constant 124 : i32
    %271 = tpu.dynamic_rotate %244 by %c124_i32_90 dim 1 : vector<4x128xf32>, i32 -> vector<4x128xf32>
    %c4_i32_91 = arith.constant 4 : i32
    %272 = tpu.dynamic_rotate %244 by %c4_i32_91 dim 1 : vector<4x128xf32>, i32 -> vector<4x128xf32>
    %273 = vector.broadcast %40 : vector<1x128xf32> to vector<4x128xf32>
    %274 = arith.mulf %271, %273 : vector<4x128xf32>
    %275 = arith.addf %270, %274 : vector<4x128xf32>
    %276 = vector.broadcast %45 : vector<1x128xf32> to vector<4x128xf32>
    %277 = arith.mulf %272, %276 : vector<4x128xf32>
    %278 = arith.addf %275, %277 : vector<4x128xf32>
    %c123_i32_92 = arith.constant 123 : i32
    %279 = tpu.dynamic_rotate %244 by %c123_i32_92 dim 1 : vector<4x128xf32>, i32 -> vector<4x128xf32>
    %c5_i32_93 = arith.constant 5 : i32
    %280 = tpu.dynamic_rotate %244 by %c5_i32_93 dim 1 : vector<4x128xf32>, i32 -> vector<4x128xf32>
    %281 = vector.broadcast %50 : vector<1x128xf32> to vector<4x128xf32>
    %282 = arith.mulf %279, %281 : vector<4x128xf32>
    %283 = arith.addf %278, %282 : vector<4x128xf32>
    %284 = vector.broadcast %55 : vector<1x128xf32> to vector<4x128xf32>
    %285 = arith.mulf %280, %284 : vector<4x128xf32>
    %286 = arith.addf %283, %285 : vector<4x128xf32>
    %287 = arith.mulf %57, %59 : vector<4x128xf32>
    %cst_94 = arith.constant 0.266011715 : f32
    %288 = vector.broadcast %cst_94 : f32 to vector<4x128xf32>
    %289 = arith.mulf %287, %288 : vector<4x128xf32>
    %c127_i32_95 = arith.constant 127 : i32
    %290 = tpu.dynamic_rotate %287 by %c127_i32_95 dim 1 : vector<4x128xf32>, i32 -> vector<4x128xf32>
    %c1_i32_96 = arith.constant 1 : i32
    %291 = tpu.dynamic_rotate %287 by %c1_i32_96 dim 1 : vector<4x128xf32>, i32 -> vector<4x128xf32>
    %292 = vector.broadcast %10 : vector<1x128xf32> to vector<4x128xf32>
    %293 = arith.mulf %290, %292 : vector<4x128xf32>
    %294 = arith.addf %289, %293 : vector<4x128xf32>
    %295 = vector.broadcast %15 : vector<1x128xf32> to vector<4x128xf32>
    %296 = arith.mulf %291, %295 : vector<4x128xf32>
    %297 = arith.addf %294, %296 : vector<4x128xf32>
    %c126_i32_97 = arith.constant 126 : i32
    %298 = tpu.dynamic_rotate %287 by %c126_i32_97 dim 1 : vector<4x128xf32>, i32 -> vector<4x128xf32>
    %c2_i32_98 = arith.constant 2 : i32
    %299 = tpu.dynamic_rotate %287 by %c2_i32_98 dim 1 : vector<4x128xf32>, i32 -> vector<4x128xf32>
    %300 = vector.broadcast %20 : vector<1x128xf32> to vector<4x128xf32>
    %301 = arith.mulf %298, %300 : vector<4x128xf32>
    %302 = arith.addf %297, %301 : vector<4x128xf32>
    %303 = vector.broadcast %25 : vector<1x128xf32> to vector<4x128xf32>
    %304 = arith.mulf %299, %303 : vector<4x128xf32>
    %305 = arith.addf %302, %304 : vector<4x128xf32>
    %c125_i32_99 = arith.constant 125 : i32
    %306 = tpu.dynamic_rotate %287 by %c125_i32_99 dim 1 : vector<4x128xf32>, i32 -> vector<4x128xf32>
    %c3_i32_100 = arith.constant 3 : i32
    %307 = tpu.dynamic_rotate %287 by %c3_i32_100 dim 1 : vector<4x128xf32>, i32 -> vector<4x128xf32>
    %308 = vector.broadcast %30 : vector<1x128xf32> to vector<4x128xf32>
    %309 = arith.mulf %306, %308 : vector<4x128xf32>
    %310 = arith.addf %305, %309 : vector<4x128xf32>
    %311 = vector.broadcast %35 : vector<1x128xf32> to vector<4x128xf32>
    %312 = arith.mulf %307, %311 : vector<4x128xf32>
    %313 = arith.addf %310, %312 : vector<4x128xf32>
    %c124_i32_101 = arith.constant 124 : i32
    %314 = tpu.dynamic_rotate %287 by %c124_i32_101 dim 1 : vector<4x128xf32>, i32 -> vector<4x128xf32>
    %c4_i32_102 = arith.constant 4 : i32
    %315 = tpu.dynamic_rotate %287 by %c4_i32_102 dim 1 : vector<4x128xf32>, i32 -> vector<4x128xf32>
    %316 = vector.broadcast %40 : vector<1x128xf32> to vector<4x128xf32>
    %317 = arith.mulf %314, %316 : vector<4x128xf32>
    %318 = arith.addf %313, %317 : vector<4x128xf32>
    %319 = vector.broadcast %45 : vector<1x128xf32> to vector<4x128xf32>
    %320 = arith.mulf %315, %319 : vector<4x128xf32>
    %321 = arith.addf %318, %320 : vector<4x128xf32>
    %c123_i32_103 = arith.constant 123 : i32
    %322 = tpu.dynamic_rotate %287 by %c123_i32_103 dim 1 : vector<4x128xf32>, i32 -> vector<4x128xf32>
    %c5_i32_104 = arith.constant 5 : i32
    %323 = tpu.dynamic_rotate %287 by %c5_i32_104 dim 1 : vector<4x128xf32>, i32 -> vector<4x128xf32>
    %324 = vector.broadcast %50 : vector<1x128xf32> to vector<4x128xf32>
    %325 = arith.mulf %322, %324 : vector<4x128xf32>
    %326 = arith.addf %321, %325 : vector<4x128xf32>
    %327 = vector.broadcast %55 : vector<1x128xf32> to vector<4x128xf32>
    %328 = arith.mulf %323, %327 : vector<4x128xf32>
    %329 = arith.addf %326, %328 : vector<4x128xf32>
    %330 = arith.mulf %158, %158 : vector<4x128xf32>
    %331 = arith.mulf %200, %200 : vector<4x128xf32>
    %332 = arith.mulf %158, %200 : vector<4x128xf32>
    %333 = arith.subf %243, %330 : vector<4x128xf32>
    %334 = arith.subf %286, %331 : vector<4x128xf32>
    %335 = arith.subf %329, %332 : vector<4x128xf32>
    %cst_105 = arith.constant 2.000000e+00 : f32
    %336 = vector.broadcast %cst_105 : f32 to vector<4x128xf32>
    %337 = arith.mulf %336, %332 : vector<4x128xf32>
    %cst_106 = arith.constant 9.99999974E-5 : f32
    %338 = vector.broadcast %cst_106 : f32 to vector<4x128xf32>
    %339 = arith.addf %337, %338 : vector<4x128xf32>
    %cst_107 = arith.constant 2.000000e+00 : f32
    %340 = vector.broadcast %cst_107 : f32 to vector<4x128xf32>
    %341 = arith.mulf %340, %335 : vector<4x128xf32>
    %cst_108 = arith.constant 8.99999984E-4 : f32
    %342 = vector.broadcast %cst_108 : f32 to vector<4x128xf32>
    %343 = arith.addf %341, %342 : vector<4x128xf32>
    %344 = arith.mulf %339, %343 : vector<4x128xf32>
    %345 = arith.addf %330, %331 : vector<4x128xf32>
    %cst_109 = arith.constant 9.99999974E-5 : f32
    %346 = vector.broadcast %cst_109 : f32 to vector<4x128xf32>
    %347 = arith.addf %345, %346 : vector<4x128xf32>
    %348 = arith.addf %333, %334 : vector<4x128xf32>
    %cst_110 = arith.constant 8.99999984E-4 : f32
    %349 = vector.broadcast %cst_110 : f32 to vector<4x128xf32>
    %350 = arith.addf %348, %349 : vector<4x128xf32>
    %351 = arith.mulf %347, %350 : vector<4x128xf32>
    %352 = arith.divf %344, %351 : vector<4x128xf32>
    %cst_111 = arith.constant 1.000000e+00 : f32
    %353 = vector.broadcast %cst_111 : f32 to vector<4x128xf32>
    %354 = arith.subf %353, %352 : vector<4x128xf32>
    %355 = vector.shape_cast %354 : vector<4x128xf32> to vector<1x4x128xf32>
    %cst_112 = arith.constant dense<0.000000e+00> : vector<1xf32>
    %356 = vector.multi_reduction <add>, %355, %cst_112 [1, 2] : vector<1x4x128xf32> to vector<1xf32>
    %357 = vector.shape_cast %356 : vector<1xf32> to vector<1x1x1xf32>
    %358 = vector.extract %357[0, 0, 0] : f32 from vector<1x1x1xf32>
    %cst_113 = arith.constant 0.000000e+00 : f32
    %359 = arith.addf %cst_113, %358 : f32
    %360 = arith.mulf %61, %3 : vector<4x128xf32>
    %cst_114 = arith.constant dense<0.000000e+00> : vector<4xf32>
    %361 = vector.multi_reduction <add>, %360, %cst_114 [1] : vector<4x128xf32> to vector<4xf32>
    %362 = vector.shape_cast %361 : vector<4xf32> to vector<4x1xf32>
    %cst_115 = arith.constant dense<0.000000e+00> : vector<1xf32>
    %363 = vector.multi_reduction <add>, %362, %cst_115 [0] : vector<4x1xf32> to vector<1xf32>
    %364 = vector.shape_cast %363 : vector<1xf32> to vector<1x1xf32>
    %365 = arith.addf %364, %4 : vector<1x1xf32>
    %366 = arith.mulf %57, %3 : vector<4x128xf32>
    %cst_116 = arith.constant dense<0.000000e+00> : vector<4xf32>
    %367 = vector.multi_reduction <add>, %366, %cst_116 [1] : vector<4x128xf32> to vector<4xf32>
    %368 = vector.shape_cast %367 : vector<4xf32> to vector<4x1xf32>
    %cst_117 = arith.constant dense<0.000000e+00> : vector<1xf32>
    %369 = vector.multi_reduction <add>, %368, %cst_117 [0] : vector<4x1xf32> to vector<1xf32>
    %370 = vector.shape_cast %369 : vector<1xf32> to vector<1x1xf32>
    %371 = arith.addf %370, %4 : vector<1x1xf32>
    %cst_118 = arith.constant 0.000000e+00 : f32
    %372 = vector.broadcast %cst_118 : f32 to vector<1x1xf32>
    %373 = arith.subf %372, %365 : vector<1x1xf32>
    %cst_119 = arith.constant 0.000000e+00 : f32
    %374 = vector.broadcast %cst_119 : f32 to vector<1x1xf32>
    %375 = arith.maximumf %373, %374 : vector<1x1xf32>
    %376 = math.absf %373 : vector<1x1xf32>
    %cst_120 = arith.constant 0.000000e+00 : f32
    %377 = vector.broadcast %cst_120 : f32 to vector<1x1xf32>
    %378 = arith.subf %377, %376 : vector<1x1xf32>
    %379 = math.exp %378 : vector<1x1xf32>
    %cst_121 = arith.constant 1.000000e+00 : f32
    %380 = vector.broadcast %cst_121 : f32 to vector<1x1xf32>
    %381 = arith.addf %380, %379 : vector<1x1xf32>
    %382 = math.log %381 : vector<1x1xf32>
    %383 = arith.addf %375, %382 : vector<1x1xf32>
    %384 = vector.shape_cast %383 : vector<1x1xf32> to vector<1x1x1xf32>
    %cst_122 = arith.constant dense<0.000000e+00> : vector<1xf32>
    %385 = vector.multi_reduction <add>, %384, %cst_122 [1, 2] : vector<1x1x1xf32> to vector<1xf32>
    %386 = vector.shape_cast %385 : vector<1xf32> to vector<1x1x1xf32>
    %387 = vector.extract %386[0, 0, 0] : f32 from vector<1x1x1xf32>
    %cst_123 = arith.constant 0.000000e+00 : f32
    %388 = arith.addf %cst_123, %387 : f32
    %cst_124 = arith.constant 0.000000e+00 : f32
    %389 = vector.broadcast %cst_124 : f32 to vector<1x1xf32>
    %390 = arith.maximumf %371, %389 : vector<1x1xf32>
    %391 = math.absf %371 : vector<1x1xf32>
    %cst_125 = arith.constant 0.000000e+00 : f32
    %392 = vector.broadcast %cst_125 : f32 to vector<1x1xf32>
    %393 = arith.subf %392, %391 : vector<1x1xf32>
    %394 = math.exp %393 : vector<1x1xf32>
    %cst_126 = arith.constant 1.000000e+00 : f32
    %395 = vector.broadcast %cst_126 : f32 to vector<1x1xf32>
    %396 = arith.addf %395, %394 : vector<1x1xf32>
    %397 = math.log %396 : vector<1x1xf32>
    %398 = arith.addf %390, %397 : vector<1x1xf32>
    %399 = vector.shape_cast %398 : vector<1x1xf32> to vector<1x1x1xf32>
    %cst_127 = arith.constant dense<0.000000e+00> : vector<1xf32>
    %400 = vector.multi_reduction <add>, %399, %cst_127 [1, 2] : vector<1x1x1xf32> to vector<1xf32>
    %401 = vector.shape_cast %400 : vector<1xf32> to vector<1x1x1xf32>
    %402 = vector.extract %401[0, 0, 0] : f32 from vector<1x1x1xf32>
    %cst_128 = arith.constant 0.000000e+00 : f32
    %403 = arith.addf %cst_128, %402 : f32
    %c1 = arith.constant 1 : index
    %c0_129 = arith.constant 0 : index
    %c0_130 = arith.constant 0 : index
    %404 = vector.load %arg1[%c1, %c0_129, %c0_130] : memref<2x4x128xf32, #tpu.memory_space<vmem>>, vector<1x4x128xf32>
    %405 = vector.shape_cast %404 : vector<1x4x128xf32> to vector<4x128xf32>
    %c1_131 = arith.constant 1 : index
    %c0_132 = arith.constant 0 : index
    %c0_133 = arith.constant 0 : index
    %406 = vector.load %arg2[%c1_131, %c0_132, %c0_133] : memref<2x4x128xf32, #tpu.memory_space<vmem>>, vector<1x4x128xf32>
    %407 = vector.shape_cast %406 : vector<1x4x128xf32> to vector<4x128xf32>
    %c1_134 = arith.constant 1 : index
    %c0_135 = arith.constant 0 : index
    %c0_136 = arith.constant 0 : index
    %408 = vector.load %arg3[%c1_134, %c0_135, %c0_136] : memref<2x4x128xf32, #tpu.memory_space<vmem>>, vector<1x4x128xf32>
    %409 = vector.shape_cast %408 : vector<1x4x128xf32> to vector<4x128xf32>
    %410 = arith.subf %405, %407 : vector<4x128xf32>
    %411 = arith.mulf %410, %410 : vector<4x128xf32>
    %412 = vector.shape_cast %411 : vector<4x128xf32> to vector<1x4x128xf32>
    %cst_137 = arith.constant dense<0.000000e+00> : vector<1xf32>
    %413 = vector.multi_reduction <add>, %412, %cst_137 [1, 2] : vector<1x4x128xf32> to vector<1xf32>
    %414 = vector.shape_cast %413 : vector<1xf32> to vector<1x1x1xf32>
    %415 = vector.extract %414[0, 0, 0] : f32 from vector<1x1x1xf32>
    %416 = arith.addf %68, %415 : f32
    %cst_138 = arith.constant dense<0.000000e+00> : vector<128xf32>
    %417 = vector.multi_reduction <add>, %405, %cst_138 [0] : vector<4x128xf32> to vector<128xf32>
    %418 = vector.shape_cast %417 : vector<128xf32> to vector<1x128xf32>
    %cst_139 = arith.constant 4.000000e+00 : f32
    %419 = vector.broadcast %cst_139 : f32 to vector<1x128xf32>
    %420 = arith.divf %418, %419 : vector<1x128xf32>
    %421 = vector.broadcast %420 : vector<1x128xf32> to vector<4x128xf32>
    %422 = arith.subf %405, %421 : vector<4x128xf32>
    %cst_140 = arith.constant dense<0.000000e+00> : vector<128xf32>
    %423 = vector.multi_reduction <add>, %407, %cst_140 [0] : vector<4x128xf32> to vector<128xf32>
    %424 = vector.shape_cast %423 : vector<128xf32> to vector<1x128xf32>
    %cst_141 = arith.constant 4.000000e+00 : f32
    %425 = vector.broadcast %cst_141 : f32 to vector<1x128xf32>
    %426 = arith.divf %424, %425 : vector<1x128xf32>
    %427 = vector.broadcast %426 : vector<1x128xf32> to vector<4x128xf32>
    %428 = arith.subf %407, %427 : vector<4x128xf32>
    %429 = arith.mulf %422, %422 : vector<4x128xf32>
    %cst_142 = arith.constant dense<0.000000e+00> : vector<128xf32>
    %430 = vector.multi_reduction <add>, %429, %cst_142 [0] : vector<4x128xf32> to vector<128xf32>
    %431 = vector.shape_cast %430 : vector<128xf32> to vector<1x128xf32>
    %cst_143 = arith.constant 9.99999993E-9 : f32
    %432 = vector.broadcast %cst_143 : f32 to vector<1x128xf32>
    %433 = arith.maximumf %431, %432 : vector<1x128xf32>
    %434 = arith.mulf %428, %428 : vector<4x128xf32>
    %cst_144 = arith.constant dense<0.000000e+00> : vector<128xf32>
    %435 = vector.multi_reduction <add>, %434, %cst_144 [0] : vector<4x128xf32> to vector<128xf32>
    %436 = vector.shape_cast %435 : vector<128xf32> to vector<1x128xf32>
    %cst_145 = arith.constant 9.99999993E-9 : f32
    %437 = vector.broadcast %cst_145 : f32 to vector<1x128xf32>
    %438 = arith.maximumf %436, %437 : vector<1x128xf32>
    %439 = arith.mulf %422, %428 : vector<4x128xf32>
    %cst_146 = arith.constant dense<0.000000e+00> : vector<128xf32>
    %440 = vector.multi_reduction <add>, %439, %cst_146 [0] : vector<4x128xf32> to vector<128xf32>
    %441 = vector.shape_cast %440 : vector<128xf32> to vector<1x128xf32>
    %442 = arith.mulf %433, %438 : vector<1x128xf32>
    %443 = math.rsqrt %442 : vector<1x128xf32>
    %444 = arith.mulf %441, %443 : vector<1x128xf32>
    %cst_147 = arith.constant -1.000000e+00 : f32
    %cst_148 = arith.constant 1.000000e+00 : f32
    %445 = vector.broadcast %cst_147 : f32 to vector<1x128xf32>
    %446 = arith.maximumf %445, %444 : vector<1x128xf32>
    %447 = vector.broadcast %cst_148 : f32 to vector<1x128xf32>
    %448 = arith.minimumf %447, %446 : vector<1x128xf32>
    %cst_149 = arith.constant 1.000000e+00 : f32
    %449 = vector.broadcast %cst_149 : f32 to vector<1x128xf32>
    %450 = arith.subf %449, %448 : vector<1x128xf32>
    %451 = vector.shape_cast %450 : vector<1x128xf32> to vector<1x1x128xf32>
    %cst_150 = arith.constant dense<0.000000e+00> : vector<1xf32>
    %452 = vector.multi_reduction <add>, %451, %cst_150 [1, 2] : vector<1x1x128xf32> to vector<1xf32>
    %453 = vector.shape_cast %452 : vector<1xf32> to vector<1x1x1xf32>
    %454 = vector.extract %453[0, 0, 0] : f32 from vector<1x1x1xf32>
    %455 = arith.addf %107, %454 : f32
    %456 = vector.extract_strided_slice %410 {offsets = [1, 0], sizes = [3, 128], strides = [1, 1]} : vector<4x128xf32> to vector<3x128xf32>
    %457 = vector.extract_strided_slice %410 {offsets = [0, 0], sizes = [3, 128], strides = [1, 1]} : vector<4x128xf32> to vector<3x128xf32>
    %458 = arith.subf %456, %457 : vector<3x128xf32>
    %459 = arith.mulf %458, %458 : vector<3x128xf32>
    %460 = vector.shape_cast %459 : vector<3x128xf32> to vector<1x3x128xf32>
    %cst_151 = arith.constant dense<0.000000e+00> : vector<1xf32>
    %461 = vector.multi_reduction <add>, %460, %cst_151 [1, 2] : vector<1x3x128xf32> to vector<1xf32>
    %462 = vector.shape_cast %461 : vector<1xf32> to vector<1x1x1xf32>
    %463 = vector.extract %462[0, 0, 0] : f32 from vector<1x1x1xf32>
    %464 = arith.addf %116, %463 : f32
    %cst_152 = arith.constant 0.266011715 : f32
    %465 = vector.broadcast %cst_152 : f32 to vector<4x128xf32>
    %466 = arith.mulf %405, %465 : vector<4x128xf32>
    %c127_i32_153 = arith.constant 127 : i32
    %467 = tpu.dynamic_rotate %405 by %c127_i32_153 dim 1 : vector<4x128xf32>, i32 -> vector<4x128xf32>
    %c1_i32_154 = arith.constant 1 : i32
    %468 = tpu.dynamic_rotate %405 by %c1_i32_154 dim 1 : vector<4x128xf32>, i32 -> vector<4x128xf32>
    %469 = vector.broadcast %10 : vector<1x128xf32> to vector<4x128xf32>
    %470 = arith.mulf %467, %469 : vector<4x128xf32>
    %471 = arith.addf %466, %470 : vector<4x128xf32>
    %472 = vector.broadcast %15 : vector<1x128xf32> to vector<4x128xf32>
    %473 = arith.mulf %468, %472 : vector<4x128xf32>
    %474 = arith.addf %471, %473 : vector<4x128xf32>
    %c126_i32_155 = arith.constant 126 : i32
    %475 = tpu.dynamic_rotate %405 by %c126_i32_155 dim 1 : vector<4x128xf32>, i32 -> vector<4x128xf32>
    %c2_i32_156 = arith.constant 2 : i32
    %476 = tpu.dynamic_rotate %405 by %c2_i32_156 dim 1 : vector<4x128xf32>, i32 -> vector<4x128xf32>
    %477 = vector.broadcast %20 : vector<1x128xf32> to vector<4x128xf32>
    %478 = arith.mulf %475, %477 : vector<4x128xf32>
    %479 = arith.addf %474, %478 : vector<4x128xf32>
    %480 = vector.broadcast %25 : vector<1x128xf32> to vector<4x128xf32>
    %481 = arith.mulf %476, %480 : vector<4x128xf32>
    %482 = arith.addf %479, %481 : vector<4x128xf32>
    %c125_i32_157 = arith.constant 125 : i32
    %483 = tpu.dynamic_rotate %405 by %c125_i32_157 dim 1 : vector<4x128xf32>, i32 -> vector<4x128xf32>
    %c3_i32_158 = arith.constant 3 : i32
    %484 = tpu.dynamic_rotate %405 by %c3_i32_158 dim 1 : vector<4x128xf32>, i32 -> vector<4x128xf32>
    %485 = vector.broadcast %30 : vector<1x128xf32> to vector<4x128xf32>
    %486 = arith.mulf %483, %485 : vector<4x128xf32>
    %487 = arith.addf %482, %486 : vector<4x128xf32>
    %488 = vector.broadcast %35 : vector<1x128xf32> to vector<4x128xf32>
    %489 = arith.mulf %484, %488 : vector<4x128xf32>
    %490 = arith.addf %487, %489 : vector<4x128xf32>
    %c124_i32_159 = arith.constant 124 : i32
    %491 = tpu.dynamic_rotate %405 by %c124_i32_159 dim 1 : vector<4x128xf32>, i32 -> vector<4x128xf32>
    %c4_i32_160 = arith.constant 4 : i32
    %492 = tpu.dynamic_rotate %405 by %c4_i32_160 dim 1 : vector<4x128xf32>, i32 -> vector<4x128xf32>
    %493 = vector.broadcast %40 : vector<1x128xf32> to vector<4x128xf32>
    %494 = arith.mulf %491, %493 : vector<4x128xf32>
    %495 = arith.addf %490, %494 : vector<4x128xf32>
    %496 = vector.broadcast %45 : vector<1x128xf32> to vector<4x128xf32>
    %497 = arith.mulf %492, %496 : vector<4x128xf32>
    %498 = arith.addf %495, %497 : vector<4x128xf32>
    %c123_i32_161 = arith.constant 123 : i32
    %499 = tpu.dynamic_rotate %405 by %c123_i32_161 dim 1 : vector<4x128xf32>, i32 -> vector<4x128xf32>
    %c5_i32_162 = arith.constant 5 : i32
    %500 = tpu.dynamic_rotate %405 by %c5_i32_162 dim 1 : vector<4x128xf32>, i32 -> vector<4x128xf32>
    %501 = vector.broadcast %50 : vector<1x128xf32> to vector<4x128xf32>
    %502 = arith.mulf %499, %501 : vector<4x128xf32>
    %503 = arith.addf %498, %502 : vector<4x128xf32>
    %504 = vector.broadcast %55 : vector<1x128xf32> to vector<4x128xf32>
    %505 = arith.mulf %500, %504 : vector<4x128xf32>
    %506 = arith.addf %503, %505 : vector<4x128xf32>
    %cst_163 = arith.constant 0.266011715 : f32
    %507 = vector.broadcast %cst_163 : f32 to vector<4x128xf32>
    %508 = arith.mulf %407, %507 : vector<4x128xf32>
    %c127_i32_164 = arith.constant 127 : i32
    %509 = tpu.dynamic_rotate %407 by %c127_i32_164 dim 1 : vector<4x128xf32>, i32 -> vector<4x128xf32>
    %c1_i32_165 = arith.constant 1 : i32
    %510 = tpu.dynamic_rotate %407 by %c1_i32_165 dim 1 : vector<4x128xf32>, i32 -> vector<4x128xf32>
    %511 = vector.broadcast %10 : vector<1x128xf32> to vector<4x128xf32>
    %512 = arith.mulf %509, %511 : vector<4x128xf32>
    %513 = arith.addf %508, %512 : vector<4x128xf32>
    %514 = vector.broadcast %15 : vector<1x128xf32> to vector<4x128xf32>
    %515 = arith.mulf %510, %514 : vector<4x128xf32>
    %516 = arith.addf %513, %515 : vector<4x128xf32>
    %c126_i32_166 = arith.constant 126 : i32
    %517 = tpu.dynamic_rotate %407 by %c126_i32_166 dim 1 : vector<4x128xf32>, i32 -> vector<4x128xf32>
    %c2_i32_167 = arith.constant 2 : i32
    %518 = tpu.dynamic_rotate %407 by %c2_i32_167 dim 1 : vector<4x128xf32>, i32 -> vector<4x128xf32>
    %519 = vector.broadcast %20 : vector<1x128xf32> to vector<4x128xf32>
    %520 = arith.mulf %517, %519 : vector<4x128xf32>
    %521 = arith.addf %516, %520 : vector<4x128xf32>
    %522 = vector.broadcast %25 : vector<1x128xf32> to vector<4x128xf32>
    %523 = arith.mulf %518, %522 : vector<4x128xf32>
    %524 = arith.addf %521, %523 : vector<4x128xf32>
    %c125_i32_168 = arith.constant 125 : i32
    %525 = tpu.dynamic_rotate %407 by %c125_i32_168 dim 1 : vector<4x128xf32>, i32 -> vector<4x128xf32>
    %c3_i32_169 = arith.constant 3 : i32
    %526 = tpu.dynamic_rotate %407 by %c3_i32_169 dim 1 : vector<4x128xf32>, i32 -> vector<4x128xf32>
    %527 = vector.broadcast %30 : vector<1x128xf32> to vector<4x128xf32>
    %528 = arith.mulf %525, %527 : vector<4x128xf32>
    %529 = arith.addf %524, %528 : vector<4x128xf32>
    %530 = vector.broadcast %35 : vector<1x128xf32> to vector<4x128xf32>
    %531 = arith.mulf %526, %530 : vector<4x128xf32>
    %532 = arith.addf %529, %531 : vector<4x128xf32>
    %c124_i32_170 = arith.constant 124 : i32
    %533 = tpu.dynamic_rotate %407 by %c124_i32_170 dim 1 : vector<4x128xf32>, i32 -> vector<4x128xf32>
    %c4_i32_171 = arith.constant 4 : i32
    %534 = tpu.dynamic_rotate %407 by %c4_i32_171 dim 1 : vector<4x128xf32>, i32 -> vector<4x128xf32>
    %535 = vector.broadcast %40 : vector<1x128xf32> to vector<4x128xf32>
    %536 = arith.mulf %533, %535 : vector<4x128xf32>
    %537 = arith.addf %532, %536 : vector<4x128xf32>
    %538 = vector.broadcast %45 : vector<1x128xf32> to vector<4x128xf32>
    %539 = arith.mulf %534, %538 : vector<4x128xf32>
    %540 = arith.addf %537, %539 : vector<4x128xf32>
    %c123_i32_172 = arith.constant 123 : i32
    %541 = tpu.dynamic_rotate %407 by %c123_i32_172 dim 1 : vector<4x128xf32>, i32 -> vector<4x128xf32>
    %c5_i32_173 = arith.constant 5 : i32
    %542 = tpu.dynamic_rotate %407 by %c5_i32_173 dim 1 : vector<4x128xf32>, i32 -> vector<4x128xf32>
    %543 = vector.broadcast %50 : vector<1x128xf32> to vector<4x128xf32>
    %544 = arith.mulf %541, %543 : vector<4x128xf32>
    %545 = arith.addf %540, %544 : vector<4x128xf32>
    %546 = vector.broadcast %55 : vector<1x128xf32> to vector<4x128xf32>
    %547 = arith.mulf %542, %546 : vector<4x128xf32>
    %548 = arith.addf %545, %547 : vector<4x128xf32>
    %549 = arith.mulf %405, %405 : vector<4x128xf32>
    %cst_174 = arith.constant 0.266011715 : f32
    %550 = vector.broadcast %cst_174 : f32 to vector<4x128xf32>
    %551 = arith.mulf %549, %550 : vector<4x128xf32>
    %c127_i32_175 = arith.constant 127 : i32
    %552 = tpu.dynamic_rotate %549 by %c127_i32_175 dim 1 : vector<4x128xf32>, i32 -> vector<4x128xf32>
    %c1_i32_176 = arith.constant 1 : i32
    %553 = tpu.dynamic_rotate %549 by %c1_i32_176 dim 1 : vector<4x128xf32>, i32 -> vector<4x128xf32>
    %554 = vector.broadcast %10 : vector<1x128xf32> to vector<4x128xf32>
    %555 = arith.mulf %552, %554 : vector<4x128xf32>
    %556 = arith.addf %551, %555 : vector<4x128xf32>
    %557 = vector.broadcast %15 : vector<1x128xf32> to vector<4x128xf32>
    %558 = arith.mulf %553, %557 : vector<4x128xf32>
    %559 = arith.addf %556, %558 : vector<4x128xf32>
    %c126_i32_177 = arith.constant 126 : i32
    %560 = tpu.dynamic_rotate %549 by %c126_i32_177 dim 1 : vector<4x128xf32>, i32 -> vector<4x128xf32>
    %c2_i32_178 = arith.constant 2 : i32
    %561 = tpu.dynamic_rotate %549 by %c2_i32_178 dim 1 : vector<4x128xf32>, i32 -> vector<4x128xf32>
    %562 = vector.broadcast %20 : vector<1x128xf32> to vector<4x128xf32>
    %563 = arith.mulf %560, %562 : vector<4x128xf32>
    %564 = arith.addf %559, %563 : vector<4x128xf32>
    %565 = vector.broadcast %25 : vector<1x128xf32> to vector<4x128xf32>
    %566 = arith.mulf %561, %565 : vector<4x128xf32>
    %567 = arith.addf %564, %566 : vector<4x128xf32>
    %c125_i32_179 = arith.constant 125 : i32
    %568 = tpu.dynamic_rotate %549 by %c125_i32_179 dim 1 : vector<4x128xf32>, i32 -> vector<4x128xf32>
    %c3_i32_180 = arith.constant 3 : i32
    %569 = tpu.dynamic_rotate %549 by %c3_i32_180 dim 1 : vector<4x128xf32>, i32 -> vector<4x128xf32>
    %570 = vector.broadcast %30 : vector<1x128xf32> to vector<4x128xf32>
    %571 = arith.mulf %568, %570 : vector<4x128xf32>
    %572 = arith.addf %567, %571 : vector<4x128xf32>
    %573 = vector.broadcast %35 : vector<1x128xf32> to vector<4x128xf32>
    %574 = arith.mulf %569, %573 : vector<4x128xf32>
    %575 = arith.addf %572, %574 : vector<4x128xf32>
    %c124_i32_181 = arith.constant 124 : i32
    %576 = tpu.dynamic_rotate %549 by %c124_i32_181 dim 1 : vector<4x128xf32>, i32 -> vector<4x128xf32>
    %c4_i32_182 = arith.constant 4 : i32
    %577 = tpu.dynamic_rotate %549 by %c4_i32_182 dim 1 : vector<4x128xf32>, i32 -> vector<4x128xf32>
    %578 = vector.broadcast %40 : vector<1x128xf32> to vector<4x128xf32>
    %579 = arith.mulf %576, %578 : vector<4x128xf32>
    %580 = arith.addf %575, %579 : vector<4x128xf32>
    %581 = vector.broadcast %45 : vector<1x128xf32> to vector<4x128xf32>
    %582 = arith.mulf %577, %581 : vector<4x128xf32>
    %583 = arith.addf %580, %582 : vector<4x128xf32>
    %c123_i32_183 = arith.constant 123 : i32
    %584 = tpu.dynamic_rotate %549 by %c123_i32_183 dim 1 : vector<4x128xf32>, i32 -> vector<4x128xf32>
    %c5_i32_184 = arith.constant 5 : i32
    %585 = tpu.dynamic_rotate %549 by %c5_i32_184 dim 1 : vector<4x128xf32>, i32 -> vector<4x128xf32>
    %586 = vector.broadcast %50 : vector<1x128xf32> to vector<4x128xf32>
    %587 = arith.mulf %584, %586 : vector<4x128xf32>
    %588 = arith.addf %583, %587 : vector<4x128xf32>
    %589 = vector.broadcast %55 : vector<1x128xf32> to vector<4x128xf32>
    %590 = arith.mulf %585, %589 : vector<4x128xf32>
    %591 = arith.addf %588, %590 : vector<4x128xf32>
    %592 = arith.mulf %407, %407 : vector<4x128xf32>
    %cst_185 = arith.constant 0.266011715 : f32
    %593 = vector.broadcast %cst_185 : f32 to vector<4x128xf32>
    %594 = arith.mulf %592, %593 : vector<4x128xf32>
    %c127_i32_186 = arith.constant 127 : i32
    %595 = tpu.dynamic_rotate %592 by %c127_i32_186 dim 1 : vector<4x128xf32>, i32 -> vector<4x128xf32>
    %c1_i32_187 = arith.constant 1 : i32
    %596 = tpu.dynamic_rotate %592 by %c1_i32_187 dim 1 : vector<4x128xf32>, i32 -> vector<4x128xf32>
    %597 = vector.broadcast %10 : vector<1x128xf32> to vector<4x128xf32>
    %598 = arith.mulf %595, %597 : vector<4x128xf32>
    %599 = arith.addf %594, %598 : vector<4x128xf32>
    %600 = vector.broadcast %15 : vector<1x128xf32> to vector<4x128xf32>
    %601 = arith.mulf %596, %600 : vector<4x128xf32>
    %602 = arith.addf %599, %601 : vector<4x128xf32>
    %c126_i32_188 = arith.constant 126 : i32
    %603 = tpu.dynamic_rotate %592 by %c126_i32_188 dim 1 : vector<4x128xf32>, i32 -> vector<4x128xf32>
    %c2_i32_189 = arith.constant 2 : i32
    %604 = tpu.dynamic_rotate %592 by %c2_i32_189 dim 1 : vector<4x128xf32>, i32 -> vector<4x128xf32>
    %605 = vector.broadcast %20 : vector<1x128xf32> to vector<4x128xf32>
    %606 = arith.mulf %603, %605 : vector<4x128xf32>
    %607 = arith.addf %602, %606 : vector<4x128xf32>
    %608 = vector.broadcast %25 : vector<1x128xf32> to vector<4x128xf32>
    %609 = arith.mulf %604, %608 : vector<4x128xf32>
    %610 = arith.addf %607, %609 : vector<4x128xf32>
    %c125_i32_190 = arith.constant 125 : i32
    %611 = tpu.dynamic_rotate %592 by %c125_i32_190 dim 1 : vector<4x128xf32>, i32 -> vector<4x128xf32>
    %c3_i32_191 = arith.constant 3 : i32
    %612 = tpu.dynamic_rotate %592 by %c3_i32_191 dim 1 : vector<4x128xf32>, i32 -> vector<4x128xf32>
    %613 = vector.broadcast %30 : vector<1x128xf32> to vector<4x128xf32>
    %614 = arith.mulf %611, %613 : vector<4x128xf32>
    %615 = arith.addf %610, %614 : vector<4x128xf32>
    %616 = vector.broadcast %35 : vector<1x128xf32> to vector<4x128xf32>
    %617 = arith.mulf %612, %616 : vector<4x128xf32>
    %618 = arith.addf %615, %617 : vector<4x128xf32>
    %c124_i32_192 = arith.constant 124 : i32
    %619 = tpu.dynamic_rotate %592 by %c124_i32_192 dim 1 : vector<4x128xf32>, i32 -> vector<4x128xf32>
    %c4_i32_193 = arith.constant 4 : i32
    %620 = tpu.dynamic_rotate %592 by %c4_i32_193 dim 1 : vector<4x128xf32>, i32 -> vector<4x128xf32>
    %621 = vector.broadcast %40 : vector<1x128xf32> to vector<4x128xf32>
    %622 = arith.mulf %619, %621 : vector<4x128xf32>
    %623 = arith.addf %618, %622 : vector<4x128xf32>
    %624 = vector.broadcast %45 : vector<1x128xf32> to vector<4x128xf32>
    %625 = arith.mulf %620, %624 : vector<4x128xf32>
    %626 = arith.addf %623, %625 : vector<4x128xf32>
    %c123_i32_194 = arith.constant 123 : i32
    %627 = tpu.dynamic_rotate %592 by %c123_i32_194 dim 1 : vector<4x128xf32>, i32 -> vector<4x128xf32>
    %c5_i32_195 = arith.constant 5 : i32
    %628 = tpu.dynamic_rotate %592 by %c5_i32_195 dim 1 : vector<4x128xf32>, i32 -> vector<4x128xf32>
    %629 = vector.broadcast %50 : vector<1x128xf32> to vector<4x128xf32>
    %630 = arith.mulf %627, %629 : vector<4x128xf32>
    %631 = arith.addf %626, %630 : vector<4x128xf32>
    %632 = vector.broadcast %55 : vector<1x128xf32> to vector<4x128xf32>
    %633 = arith.mulf %628, %632 : vector<4x128xf32>
    %634 = arith.addf %631, %633 : vector<4x128xf32>
    %635 = arith.mulf %405, %407 : vector<4x128xf32>
    %cst_196 = arith.constant 0.266011715 : f32
    %636 = vector.broadcast %cst_196 : f32 to vector<4x128xf32>
    %637 = arith.mulf %635, %636 : vector<4x128xf32>
    %c127_i32_197 = arith.constant 127 : i32
    %638 = tpu.dynamic_rotate %635 by %c127_i32_197 dim 1 : vector<4x128xf32>, i32 -> vector<4x128xf32>
    %c1_i32_198 = arith.constant 1 : i32
    %639 = tpu.dynamic_rotate %635 by %c1_i32_198 dim 1 : vector<4x128xf32>, i32 -> vector<4x128xf32>
    %640 = vector.broadcast %10 : vector<1x128xf32> to vector<4x128xf32>
    %641 = arith.mulf %638, %640 : vector<4x128xf32>
    %642 = arith.addf %637, %641 : vector<4x128xf32>
    %643 = vector.broadcast %15 : vector<1x128xf32> to vector<4x128xf32>
    %644 = arith.mulf %639, %643 : vector<4x128xf32>
    %645 = arith.addf %642, %644 : vector<4x128xf32>
    %c126_i32_199 = arith.constant 126 : i32
    %646 = tpu.dynamic_rotate %635 by %c126_i32_199 dim 1 : vector<4x128xf32>, i32 -> vector<4x128xf32>
    %c2_i32_200 = arith.constant 2 : i32
    %647 = tpu.dynamic_rotate %635 by %c2_i32_200 dim 1 : vector<4x128xf32>, i32 -> vector<4x128xf32>
    %648 = vector.broadcast %20 : vector<1x128xf32> to vector<4x128xf32>
    %649 = arith.mulf %646, %648 : vector<4x128xf32>
    %650 = arith.addf %645, %649 : vector<4x128xf32>
    %651 = vector.broadcast %25 : vector<1x128xf32> to vector<4x128xf32>
    %652 = arith.mulf %647, %651 : vector<4x128xf32>
    %653 = arith.addf %650, %652 : vector<4x128xf32>
    %c125_i32_201 = arith.constant 125 : i32
    %654 = tpu.dynamic_rotate %635 by %c125_i32_201 dim 1 : vector<4x128xf32>, i32 -> vector<4x128xf32>
    %c3_i32_202 = arith.constant 3 : i32
    %655 = tpu.dynamic_rotate %635 by %c3_i32_202 dim 1 : vector<4x128xf32>, i32 -> vector<4x128xf32>
    %656 = vector.broadcast %30 : vector<1x128xf32> to vector<4x128xf32>
    %657 = arith.mulf %654, %656 : vector<4x128xf32>
    %658 = arith.addf %653, %657 : vector<4x128xf32>
    %659 = vector.broadcast %35 : vector<1x128xf32> to vector<4x128xf32>
    %660 = arith.mulf %655, %659 : vector<4x128xf32>
    %661 = arith.addf %658, %660 : vector<4x128xf32>
    %c124_i32_203 = arith.constant 124 : i32
    %662 = tpu.dynamic_rotate %635 by %c124_i32_203 dim 1 : vector<4x128xf32>, i32 -> vector<4x128xf32>
    %c4_i32_204 = arith.constant 4 : i32
    %663 = tpu.dynamic_rotate %635 by %c4_i32_204 dim 1 : vector<4x128xf32>, i32 -> vector<4x128xf32>
    %664 = vector.broadcast %40 : vector<1x128xf32> to vector<4x128xf32>
    %665 = arith.mulf %662, %664 : vector<4x128xf32>
    %666 = arith.addf %661, %665 : vector<4x128xf32>
    %667 = vector.broadcast %45 : vector<1x128xf32> to vector<4x128xf32>
    %668 = arith.mulf %663, %667 : vector<4x128xf32>
    %669 = arith.addf %666, %668 : vector<4x128xf32>
    %c123_i32_205 = arith.constant 123 : i32
    %670 = tpu.dynamic_rotate %635 by %c123_i32_205 dim 1 : vector<4x128xf32>, i32 -> vector<4x128xf32>
    %c5_i32_206 = arith.constant 5 : i32
    %671 = tpu.dynamic_rotate %635 by %c5_i32_206 dim 1 : vector<4x128xf32>, i32 -> vector<4x128xf32>
    %672 = vector.broadcast %50 : vector<1x128xf32> to vector<4x128xf32>
    %673 = arith.mulf %670, %672 : vector<4x128xf32>
    %674 = arith.addf %669, %673 : vector<4x128xf32>
    %675 = vector.broadcast %55 : vector<1x128xf32> to vector<4x128xf32>
    %676 = arith.mulf %671, %675 : vector<4x128xf32>
    %677 = arith.addf %674, %676 : vector<4x128xf32>
    %678 = arith.mulf %506, %506 : vector<4x128xf32>
    %679 = arith.mulf %548, %548 : vector<4x128xf32>
    %680 = arith.mulf %506, %548 : vector<4x128xf32>
    %681 = arith.subf %591, %678 : vector<4x128xf32>
    %682 = arith.subf %634, %679 : vector<4x128xf32>
    %683 = arith.subf %677, %680 : vector<4x128xf32>
    %cst_207 = arith.constant 2.000000e+00 : f32
    %684 = vector.broadcast %cst_207 : f32 to vector<4x128xf32>
    %685 = arith.mulf %684, %680 : vector<4x128xf32>
    %cst_208 = arith.constant 9.99999974E-5 : f32
    %686 = vector.broadcast %cst_208 : f32 to vector<4x128xf32>
    %687 = arith.addf %685, %686 : vector<4x128xf32>
    %cst_209 = arith.constant 2.000000e+00 : f32
    %688 = vector.broadcast %cst_209 : f32 to vector<4x128xf32>
    %689 = arith.mulf %688, %683 : vector<4x128xf32>
    %cst_210 = arith.constant 8.99999984E-4 : f32
    %690 = vector.broadcast %cst_210 : f32 to vector<4x128xf32>
    %691 = arith.addf %689, %690 : vector<4x128xf32>
    %692 = arith.mulf %687, %691 : vector<4x128xf32>
    %693 = arith.addf %678, %679 : vector<4x128xf32>
    %cst_211 = arith.constant 9.99999974E-5 : f32
    %694 = vector.broadcast %cst_211 : f32 to vector<4x128xf32>
    %695 = arith.addf %693, %694 : vector<4x128xf32>
    %696 = arith.addf %681, %682 : vector<4x128xf32>
    %cst_212 = arith.constant 8.99999984E-4 : f32
    %697 = vector.broadcast %cst_212 : f32 to vector<4x128xf32>
    %698 = arith.addf %696, %697 : vector<4x128xf32>
    %699 = arith.mulf %695, %698 : vector<4x128xf32>
    %700 = arith.divf %692, %699 : vector<4x128xf32>
    %cst_213 = arith.constant 1.000000e+00 : f32
    %701 = vector.broadcast %cst_213 : f32 to vector<4x128xf32>
    %702 = arith.subf %701, %700 : vector<4x128xf32>
    %703 = vector.shape_cast %702 : vector<4x128xf32> to vector<1x4x128xf32>
    %cst_214 = arith.constant dense<0.000000e+00> : vector<1xf32>
    %704 = vector.multi_reduction <add>, %703, %cst_214 [1, 2] : vector<1x4x128xf32> to vector<1xf32>
    %705 = vector.shape_cast %704 : vector<1xf32> to vector<1x1x1xf32>
    %706 = vector.extract %705[0, 0, 0] : f32 from vector<1x1x1xf32>
    %707 = arith.addf %359, %706 : f32
    %708 = arith.mulf %409, %3 : vector<4x128xf32>
    %cst_215 = arith.constant dense<0.000000e+00> : vector<4xf32>
    %709 = vector.multi_reduction <add>, %708, %cst_215 [1] : vector<4x128xf32> to vector<4xf32>
    %710 = vector.shape_cast %709 : vector<4xf32> to vector<4x1xf32>
    %cst_216 = arith.constant dense<0.000000e+00> : vector<1xf32>
    %711 = vector.multi_reduction <add>, %710, %cst_216 [0] : vector<4x1xf32> to vector<1xf32>
    %712 = vector.shape_cast %711 : vector<1xf32> to vector<1x1xf32>
    %713 = arith.addf %712, %4 : vector<1x1xf32>
    %714 = arith.mulf %405, %3 : vector<4x128xf32>
    %cst_217 = arith.constant dense<0.000000e+00> : vector<4xf32>
    %715 = vector.multi_reduction <add>, %714, %cst_217 [1] : vector<4x128xf32> to vector<4xf32>
    %716 = vector.shape_cast %715 : vector<4xf32> to vector<4x1xf32>
    %cst_218 = arith.constant dense<0.000000e+00> : vector<1xf32>
    %717 = vector.multi_reduction <add>, %716, %cst_218 [0] : vector<4x1xf32> to vector<1xf32>
    %718 = vector.shape_cast %717 : vector<1xf32> to vector<1x1xf32>
    %719 = arith.addf %718, %4 : vector<1x1xf32>
    %cst_219 = arith.constant 0.000000e+00 : f32
    %720 = vector.broadcast %cst_219 : f32 to vector<1x1xf32>
    %721 = arith.subf %720, %713 : vector<1x1xf32>
    %cst_220 = arith.constant 0.000000e+00 : f32
    %722 = vector.broadcast %cst_220 : f32 to vector<1x1xf32>
    %723 = arith.maximumf %721, %722 : vector<1x1xf32>
    %724 = math.absf %721 : vector<1x1xf32>
    %cst_221 = arith.constant 0.000000e+00 : f32
    %725 = vector.broadcast %cst_221 : f32 to vector<1x1xf32>
    %726 = arith.subf %725, %724 : vector<1x1xf32>
    %727 = math.exp %726 : vector<1x1xf32>
    %cst_222 = arith.constant 1.000000e+00 : f32
    %728 = vector.broadcast %cst_222 : f32 to vector<1x1xf32>
    %729 = arith.addf %728, %727 : vector<1x1xf32>
    %730 = math.log %729 : vector<1x1xf32>
    %731 = arith.addf %723, %730 : vector<1x1xf32>
    %732 = vector.shape_cast %731 : vector<1x1xf32> to vector<1x1x1xf32>
    %cst_223 = arith.constant dense<0.000000e+00> : vector<1xf32>
    %733 = vector.multi_reduction <add>, %732, %cst_223 [1, 2] : vector<1x1x1xf32> to vector<1xf32>
    %734 = vector.shape_cast %733 : vector<1xf32> to vector<1x1x1xf32>
    %735 = vector.extract %734[0, 0, 0] : f32 from vector<1x1x1xf32>
    %736 = arith.addf %388, %735 : f32
    %cst_224 = arith.constant 0.000000e+00 : f32
    %737 = vector.broadcast %cst_224 : f32 to vector<1x1xf32>
    %738 = arith.maximumf %719, %737 : vector<1x1xf32>
    %739 = math.absf %719 : vector<1x1xf32>
    %cst_225 = arith.constant 0.000000e+00 : f32
    %740 = vector.broadcast %cst_225 : f32 to vector<1x1xf32>
    %741 = arith.subf %740, %739 : vector<1x1xf32>
    %742 = math.exp %741 : vector<1x1xf32>
    %cst_226 = arith.constant 1.000000e+00 : f32
    %743 = vector.broadcast %cst_226 : f32 to vector<1x1xf32>
    %744 = arith.addf %743, %742 : vector<1x1xf32>
    %745 = math.log %744 : vector<1x1xf32>
    %746 = arith.addf %738, %745 : vector<1x1xf32>
    %747 = vector.shape_cast %746 : vector<1x1xf32> to vector<1x1x1xf32>
    %cst_227 = arith.constant dense<0.000000e+00> : vector<1xf32>
    %748 = vector.multi_reduction <add>, %747, %cst_227 [1, 2] : vector<1x1x1xf32> to vector<1xf32>
    %749 = vector.shape_cast %748 : vector<1xf32> to vector<1x1x1xf32>
    %750 = vector.extract %749[0, 0, 0] : f32 from vector<1x1x1xf32>
    %751 = arith.addf %403, %750 : f32
    %c0_228 = arith.constant 0 : index
    %752 = memref.load %arg7[%c0_228] : memref<6xf32, #tpu.memory_space<smem>>
    %753 = arith.addf %752, %416 : f32
    %c0_229 = arith.constant 0 : index
    %754 = memref.load %arg7[%c0_229] : memref<6xf32, #tpu.memory_space<smem>>
    memref.store %753, %arg7[%c0_229] : memref<6xf32, #tpu.memory_space<smem>>
    %c1_230 = arith.constant 1 : index
    %755 = memref.load %arg7[%c1_230] : memref<6xf32, #tpu.memory_space<smem>>
    %756 = arith.addf %755, %455 : f32
    %c1_231 = arith.constant 1 : index
    %757 = memref.load %arg7[%c1_231] : memref<6xf32, #tpu.memory_space<smem>>
    memref.store %756, %arg7[%c1_231] : memref<6xf32, #tpu.memory_space<smem>>
    %c2 = arith.constant 2 : index
    %758 = memref.load %arg7[%c2] : memref<6xf32, #tpu.memory_space<smem>>
    %759 = arith.addf %758, %464 : f32
    %c2_232 = arith.constant 2 : index
    %760 = memref.load %arg7[%c2_232] : memref<6xf32, #tpu.memory_space<smem>>
    memref.store %759, %arg7[%c2_232] : memref<6xf32, #tpu.memory_space<smem>>
    %c3 = arith.constant 3 : index
    %761 = memref.load %arg7[%c3] : memref<6xf32, #tpu.memory_space<smem>>
    %762 = arith.addf %761, %707 : f32
    %c3_233 = arith.constant 3 : index
    %763 = memref.load %arg7[%c3_233] : memref<6xf32, #tpu.memory_space<smem>>
    memref.store %762, %arg7[%c3_233] : memref<6xf32, #tpu.memory_space<smem>>
    %c4 = arith.constant 4 : index
    %764 = memref.load %arg7[%c4] : memref<6xf32, #tpu.memory_space<smem>>
    %765 = arith.addf %764, %736 : f32
    %c4_234 = arith.constant 4 : index
    %766 = memref.load %arg7[%c4_234] : memref<6xf32, #tpu.memory_space<smem>>
    memref.store %765, %arg7[%c4_234] : memref<6xf32, #tpu.memory_space<smem>>
    %c5 = arith.constant 5 : index
    %767 = memref.load %arg7[%c5] : memref<6xf32, #tpu.memory_space<smem>>
    %768 = arith.addf %767, %751 : f32
    %c5_235 = arith.constant 5 : index
    %769 = memref.load %arg7[%c5_235] : memref<6xf32, #tpu.memory_space<smem>>
    memref.store %768, %arg7[%c5_235] : memref<6xf32, #tpu.memory_space<smem>>
    %c0_i32_236 = arith.constant 0 : i32
    %770 = arith.cmpi eq, %arg0, %c0_i32_236 : i32
    %771 = arith.extui %770 : i1 to i32
    %c0_i32_237 = arith.constant 0 : i32
    %772 = arith.cmpi ne, %771, %c0_i32_237 : i32
    scf.if %772 {
      %c0_238 = arith.constant 0 : index
      %773 = memref.load %arg7[%c0_238] : memref<6xf32, #tpu.memory_space<smem>>
      %cst_239 = arith.constant 9.765625E-4 : f32
      %774 = arith.mulf %773, %cst_239 : f32
      %c1_240 = arith.constant 1 : index
      %775 = memref.load %arg7[%c1_240] : memref<6xf32, #tpu.memory_space<smem>>
      %cst_241 = arith.constant 3.906250e-03 : f32
      %776 = arith.mulf %775, %cst_241 : f32
      %c2_242 = arith.constant 2 : index
      %777 = memref.load %arg7[%c2_242] : memref<6xf32, #tpu.memory_space<smem>>
      %cst_243 = arith.constant 0.00130208337 : f32
      %778 = arith.mulf %777, %cst_243 : f32
      %c3_244 = arith.constant 3 : index
      %779 = memref.load %arg7[%c3_244] : memref<6xf32, #tpu.memory_space<smem>>
      %cst_245 = arith.constant 9.765625E-4 : f32
      %780 = arith.mulf %779, %cst_245 : f32
      %c4_246 = arith.constant 4 : index
      %781 = memref.load %arg7[%c4_246] : memref<6xf32, #tpu.memory_space<smem>>
      %c5_247 = arith.constant 5 : index
      %782 = memref.load %arg7[%c5_247] : memref<6xf32, #tpu.memory_space<smem>>
      %783 = arith.addf %781, %782 : f32
      %cst_248 = arith.constant 5.000000e-01 : f32
      %784 = arith.mulf %783, %cst_248 : f32
      %cst_249 = arith.constant 1.000000e-01 : f32
      %785 = arith.mulf %cst_249, %774 : f32
      %cst_250 = arith.constant 1.000000e-01 : f32
      %786 = arith.mulf %cst_250, %776 : f32
      %787 = arith.addf %785, %786 : f32
      %cst_251 = arith.constant 1.000000e-01 : f32
      %788 = arith.mulf %cst_251, %778 : f32
      %789 = arith.addf %787, %788 : f32
      %cst_252 = arith.constant 3.500000e-01 : f32
      %790 = arith.mulf %cst_252, %780 : f32
      %791 = arith.addf %789, %790 : f32
      %cst_253 = arith.constant 3.500000e-01 : f32
      %792 = arith.mulf %cst_253, %784 : f32
      %793 = arith.addf %791, %792 : f32
      %c0_254 = arith.constant 0 : index
      %794 = memref.load %arg6[%c0_254] : memref<6xf32, #tpu.memory_space<smem>>
      memref.store %793, %arg6[%c0_254] : memref<6xf32, #tpu.memory_space<smem>>
      %c1_255 = arith.constant 1 : index
      %795 = memref.load %arg6[%c1_255] : memref<6xf32, #tpu.memory_space<smem>>
      memref.store %774, %arg6[%c1_255] : memref<6xf32, #tpu.memory_space<smem>>
      %c2_256 = arith.constant 2 : index
      %796 = memref.load %arg6[%c2_256] : memref<6xf32, #tpu.memory_space<smem>>
      memref.store %776, %arg6[%c2_256] : memref<6xf32, #tpu.memory_space<smem>>
      %c3_257 = arith.constant 3 : index
      %797 = memref.load %arg6[%c3_257] : memref<6xf32, #tpu.memory_space<smem>>
      memref.store %778, %arg6[%c3_257] : memref<6xf32, #tpu.memory_space<smem>>
      %c4_258 = arith.constant 4 : index
      %798 = memref.load %arg6[%c4_258] : memref<6xf32, #tpu.memory_space<smem>>
      memref.store %780, %arg6[%c4_258] : memref<6xf32, #tpu.memory_space<smem>>
      %c5_259 = arith.constant 5 : index
      %799 = memref.load %arg6[%c5_259] : memref<6xf32, #tpu.memory_space<smem>>
      memref.store %784, %arg6[%c5_259] : memref<6xf32, #tpu.memory_space<smem>>
    } else {
    }
    return
  }
  func.func @transform_0(%arg0: i32) -> (i32, i32, i32) {
    %c0_i32 = arith.constant 0 : i32
    %c0_i32_0 = arith.constant 0 : i32
    %c0_i32_1 = arith.constant 0 : i32
    return %arg0, %c0_i32, %c0_i32_0 : i32, i32, i32
  }
  func.func @transform_1(%arg0: i32) -> (i32, i32, i32) {
    %c0_i32 = arith.constant 0 : i32
    %c0_i32_0 = arith.constant 0 : i32
    %c0_i32_1 = arith.constant 0 : i32
    return %arg0, %c0_i32, %c0_i32_0 : i32, i32, i32
  }
  func.func @transform_2(%arg0: i32) -> (i32, i32, i32) {
    %c0_i32 = arith.constant 0 : i32
    %c0_i32_0 = arith.constant 0 : i32
    %c0_i32_1 = arith.constant 0 : i32
    return %arg0, %c0_i32, %c0_i32_0 : i32, i32, i32
  }
  func.func @transform_3(%arg0: i32) -> (i32, i32) {
    %c0_i32 = arith.constant 0 : i32
    %c0_i32_0 = arith.constant 0 : i32
    %c0_i32_1 = arith.constant 0 : i32
    return %c0_i32, %c0_i32_0 : i32, i32
  }
  func.func @transform_4(%arg0: i32) -> (i32, i32) {
    %c0_i32 = arith.constant 0 : i32
    %c0_i32_0 = arith.constant 0 : i32
    %c0_i32_1 = arith.constant 0 : i32
    return %c0_i32, %c0_i32_0 : i32, i32
  }
  func.func @transform_5(%arg0: i32) -> i32 {
    %c0_i32 = arith.constant 0 : i32
    %c0_i32_0 = arith.constant 0 : i32
    return %c0_i32 : i32
  }
}

</mosaic_0001>

<llo_original>
// kernel: tpu_custom_call.1
$region0: #{tpu_custom_call.1}
  #allocation0 [shape = 'u32[]', space=smem, size = 0x4, offset = 0x4, fixed_abs, tag = 'smem constant byte address 0x4 - core index']
  #allocation1 [shape = 'u32[144,128]{1,0:T(1,128)}', space=vmem, size = 0x12000, scoped, tag = 'internal scratch']
  #allocation2 [shape = 'f32[6]{0:T(128)}', space=smem, size = 0x200, scoped, tag = 'scratch operand']
  #allocation3 [shape = 'f32[1,1]{1,0:T(1,128)S(1)}', space=vmem, size = 0x200, scoped, tag = 'scoped memory for tpu_custom_call.1']
  %s0 = inlined_call_operand.hbm [shape: f32[2,4,128], index: 0, kind: input, shape index: {}]
  %s1 = inlined_call_operand.hbm [shape: f32[2,4,128], index: 1, kind: input, shape index: {}]
  %s2 = inlined_call_operand.vmem [shape: f32[2,4,128], index: 2, kind: input, shape index: {}]
  %s3 = inlined_call_operand.vmem [shape: f32[4,128], index: 3, kind: input, shape index: {}]
  %s4 = inlined_call_operand.<no memory space> [shape: f32[1,1], index: 4, kind: input, shape index: {}]
  %s5 = inlined_call_operand.hbm [shape: f32[6], index: 5, kind: output, shape index: {}]
  %s6 = sld [smem:[#allocation0]]
  $region46: #{tpu_custom_call.1} parent=0
    _
  %s8 = ssub.s32 1, %s6
  %s9 = scalar_select 0, %s8, %s6
  %v10 = vstv %s4
  %11 = vst [vmem:[#allocation3] sm:$0x1] %v10
  $region1: #{tpu_custom_call.1} parent=0
    #allocation4 [shape = 'u8[4096]{0}', space=vmem, size = 0x1000, scoped, tag = 'input window, operand 0, single buffered']
    #allocation5 [shape = 's32[1]{0}', space=sflag, size = 0x4, scoped, tag = 'scoped memory for tpu_custom_call.1']
    #allocation6 [shape = 's32[1]{0}', space=sflag, size = 0x4, scoped, tag = 'scoped memory for tpu_custom_call.1']
    #allocation7 [shape = 'u8[4096]{0}', space=vmem, size = 0x1000, scoped, tag = 'input window, operand 1, single buffered']
    #allocation8 [shape = 's32[1]{0}', space=sflag, size = 0x4, scoped, tag = 'scoped memory for tpu_custom_call.1']
    #allocation9 [shape = 'u8[512]{0}', space=smem, size = 0x200, scoped, tag = 'output window, operand 0, single buffered']
    %12 = vsyncpa [#allocation5], 0
    %13 = vsyncpa [#allocation8], 0
    %14 = vsyncpa [#allocation6], 0
    // Predicated region
    $region2: #{tpu_custom_call.1} parent=1 // pred_check
      _
    $region3: #{tpu_custom_call.1} parent=1 // pred_check_branch
      %16 = sbr.rel (0) target = $region5
    $region4: #{tpu_custom_call.1} parent=1 // pred_region
      %s18 = ssub.s32 128, 128
      %19 = vsyncadd [#allocation5], %s18
      %s20 = sshll.u32 [#allocation4], 4
      %s21 = int_to_ptr.vmem [resolvable:$true] %s20
      %26 = dma.hbm_to_vmem [thread:$0]  %s0, 128, %s21, [#allocation5], 64, 64, 4
    $region5: #{tpu_custom_call.1} parent=1 // pred_fallthru
      _
    // Predicated region
    $region6: #{tpu_custom_call.1} parent=1 // pred_check
      _
    $region7: #{tpu_custom_call.1} parent=1 // pred_check_branch
      %28 = sbr.rel (0) target = $region9
    $region8: #{tpu_custom_call.1} parent=1 // pred_region
      %s30 = ssub.s32 128, 128
      %31 = vsyncadd [#allocation8], %s30
      %s32 = sshll.u32 [#allocation7], 4
      %s33 = int_to_ptr.vmem [resolvable:$true] %s32
      %38 = dma.hbm_to_vmem [thread:$0]  %s1, 128, %s33, [#allocation8], 64, 64, 4
    $region9: #{tpu_custom_call.1} parent=1 // pred_fallthru
      _
    // Predicated region
    $region10: #{tpu_custom_call.1} parent=1 // pred_check
      _
    $region11: #{tpu_custom_call.1} parent=1 // pred_check_branch
      %40 = sbr.rel (0) target = $region13
    $region12: #{tpu_custom_call.1} parent=1 // pred_region
      _
    $region13: #{tpu_custom_call.1} parent=1 // pred_fallthru
      _
    // Predicated region
    $region14: #{tpu_custom_call.1} parent=1 // pred_check
      _
    $region15: #{tpu_custom_call.1} parent=1 // pred_check_branch
      %42 = sbr.rel (0) target = $region17
    $region16: #{tpu_custom_call.1} parent=1 // pred_region
      _
    $region17: #{tpu_custom_call.1} parent=1 // pred_fallthru
      _
    // Predicated region
    $region18: #{tpu_custom_call.1} parent=1 // pred_check
      _
    $region19: #{tpu_custom_call.1} parent=1 // pred_check_branch
      %44 = sbr.rel (0) target = $region21
    $region20: #{tpu_custom_call.1} parent=1 // pred_region
      _
    $region21: #{tpu_custom_call.1} parent=1 // pred_fallthru
      _
    // Predicated region
    $region22: #{tpu_custom_call.1} parent=1 // pred_check
      _
    $region23: #{tpu_custom_call.1} parent=1 // pred_check_branch
      %46 = sbr.rel (0) target = $region25
    $region24: #{tpu_custom_call.1} parent=1 // pred_region
      %47 = dma.done [#allocation5], 128
    $region25: #{tpu_custom_call.1} parent=1 // pred_fallthru
      _
    // Predicated region
    $region26: #{tpu_custom_call.1} parent=1 // pred_check
      _
    $region27: #{tpu_custom_call.1} parent=1 // pred_check_branch
      %49 = sbr.rel (0) target = $region29
    $region28: #{tpu_custom_call.1} parent=1 // pred_region
      %50 = dma.done [#allocation8], 128
    $region29: #{tpu_custom_call.1} parent=1 // pred_fallthru
      _
    %p51 = scmp.eq.s32.totalorder 0, 0
    // Predicated region
    $region30: #{tpu_custom_call.1} parent=1 // pred_check
      %p52 = pneg %p51
    $region31: #{tpu_custom_call.1} parent=1 // pred_check_branch
      %54 = sbr.rel (%p52) target = $region33
    $region32: #{tpu_custom_call.1} parent=1 // pred_region
      %s55 = scalar_lea.smem [#allocation2], 0
      %56 = sst [smem:[%s55]] 0.0
      %s57 = scalar_lea.smem [#allocation2], 1
      %58 = sst [smem:[%s57]] 0.0
      %s59 = scalar_lea.smem [#allocation2], 2
      %60 = sst [smem:[%s59]] 0.0
      %s61 = scalar_lea.smem [#allocation2], 3
      %62 = sst [smem:[%s61]] 0.0
      %s63 = scalar_lea.smem [#allocation2], 4
      %64 = sst [smem:[%s63]] 0.0
      %s65 = scalar_lea.smem [#allocation2], 5
      %66 = sst [smem:[%s65]] 0.0
    $region33: #{tpu_custom_call.1} parent=1 // pred_fallthru
      _
    %v67 = vld [vmem:[%s3] sm:$0xf]
    %v68 = vld [vmem:[#allocation3] sm:$0x1]
    %v69 = vlaneseq
    %v70 = vand.u32 %v69, 127
    %vm71 = vcmp.lt.s32.totalorder %v70, 127
    %v72 = vsel %vm71, 0.21300554, 0.0
    %vm73 = vcmp.ge.s32.totalorder %v70, 1
    %v74 = vsel %vm73, 0.21300554, 0.0
    %vm75 = vcmp.lt.s32.totalorder %v70, 126
    %v76 = vsel %vm75, 0.10936069, 0.0
    %vm77 = vcmp.ge.s32.totalorder %v70, 2
    %v78 = vsel %vm77, 0.10936069, 0.0
    %vm79 = vcmp.lt.s32.totalorder %v70, 125
    %v80 = vsel %vm79, 0.036000773, 0.0
    %vm81 = vcmp.ge.s32.totalorder %v70, 3
    %v82 = vsel %vm81, 0.036000773, 0.0
    %vm83 = vcmp.lt.s32.totalorder %v70, 124
    %v84 = vsel %vm83, 0.007598758, 0.0
    %vm85 = vcmp.ge.s32.totalorder %v70, 4
    %v86 = vsel %vm85, 0.007598758, 0.0
    %vm87 = vcmp.lt.s32.totalorder %v70, 123
    %v88 = vsel %vm87, 0.0010283801, 0.0
    %vm89 = vcmp.ge.s32.totalorder %v70, 5
    %v90 = vsel %vm89, 0.0010283801, 0.0
    %v91 = vld [vmem:[#allocation4] sm:$0xf]
    %v92 = vld [vmem:[#allocation7] sm:$0xf]
    %v93 = vld [vmem:[%s2] sm:$0xf]
    %v94 = vsub.f32 %v91, %v92
    %v95 = vmul.f32 %v94, %v94
    %vm96 = vcmask 1043456
    %v97 = vsel %vm96, %v95, 0.0
    %98 = vadd.xlane.f32.xlu0 %v97
    %v99 = vpop.xlane.xlu0 %98
    %v100 = vrot.slane %v99, 4
    %v101 = vadd.f32 %v99, %v100
    %v102 = vrot.slane %v101, 2
    %v103 = vadd.f32 %v101, %v102
    %v104 = vrot.slane %v103, 1
    %v105 = vadd.f32 %v103, %v104
    %s106 = vtos %v105
    %s107 = sadd.f32 %s106, 0.0
    %v108 = vsel %vm96, %v91, 0.0
    %v109 = vrot.slane %v108, 4
    %v110 = vadd.f32 %v108, %v109
    %v111 = vrot.slane %v110, 2
    %v112 = vadd.f32 %v110, %v111
    %v113 = vrot.slane %v112, 1
    %v114 = vadd.f32 %v112, %v113
    %v115 = vrcp.pop 4.0
    %v116 = vmul.f32 %v114, %v115
    %v117 = vsub.f32 %v91, %v116
    %v118 = vsel %vm96, %v92, 0.0
    %v119 = vrot.slane %v118, 4
    %v120 = vadd.f32 %v118, %v119
    %v121 = vrot.slane %v120, 2
    %v122 = vadd.f32 %v120, %v121
    %v123 = vrot.slane %v122, 1
    %v124 = vadd.f32 %v122, %v123
    %v125 = vmul.f32 %v124, %v115
    %v126 = vsub.f32 %v92, %v125
    %v127 = vmul.f32 %v117, %v117
    %v128 = vsel %vm96, %v127, 0.0
    %v129 = vrot.slane %v128, 4
    %v130 = vadd.f32 %v128, %v129
    %v131 = vrot.slane %v130, 2
    %v132 = vadd.f32 %v130, %v131
    %v133 = vrot.slane %v132, 1
    %v134 = vadd.f32 %v132, %v133
    %v135 = vmax.f32 %v134, 1e-08
    %v136 = vmul.f32 %v126, %v126
    %v137 = vsel %vm96, %v136, 0.0
    %v138 = vrot.slane %v137, 4
    %v139 = vadd.f32 %v137, %v138
    %v140 = vrot.slane %v139, 2
    %v141 = vadd.f32 %v139, %v140
    %v142 = vrot.slane %v141, 1
    %v143 = vadd.f32 %v141, %v142
    %v144 = vmax.f32 %v143, 1e-08
    %v145 = vmul.f32 %v117, %v126
    %v146 = vsel %vm96, %v145, 0.0
    %v147 = vrot.slane %v146, 4
    %v148 = vadd.f32 %v146, %v147
    %v149 = vrot.slane %v148, 2
    %v150 = vadd.f32 %v148, %v149
    %v151 = vrot.slane %v150, 1
    %v152 = vadd.f32 %v150, %v151
    %v153 = vmul.f32 %v135, %v144
    %v154 = vrsqrt.pop %v153
    %v155 = vmul.f32 %v152, %v154
    %v156 = vmax.f32 %v155, -1.0
    %v157 = vmin.f32 %v156, 1.0
    %v158 = vsub.f32 1.0, %v157
    %vm159 = vcmask 1040384
    %v160 = vsel %vm159, %v158, 0.0
    %161 = vadd.xlane.f32.xlu0 %v160
    %v162 = vpop.xlane.xlu0 %161
    %v163 = vrot.slane %v162, 4
    %v164 = vadd.f32 %v162, %v163
    %v165 = vrot.slane %v164, 2
    %v166 = vadd.f32 %v164, %v165
    %v167 = vrot.slane %v166, 1
    %v168 = vadd.f32 %v166, %v167
    %s169 = vtos %v168
    %s170 = sadd.f32 %s169, 0.0
    %v172 = vrot.slane %v94, 7
    %v174 = vsub.f32 %v94, %v172
    %v175 = vmul.f32 %v174, %v174
    %v177 = vrot.slane %v175, 1
    %vm179 = vcmask 1042432
    %v180 = vsel %vm179, %v177, 0.0
    %181 = vadd.xlane.f32.xlu0 %v180
    %v182 = vpop.xlane.xlu0 %181
    %v183 = vrot.slane %v182, 4
    %v184 = vadd.f32 %v182, %v183
    %v185 = vrot.slane %v184, 2
    %v186 = vadd.f32 %v184, %v185
    %v187 = vrot.slane %v186, 1
    %v188 = vadd.f32 %v186, %v187
    %s189 = vtos %v188
    %s190 = sadd.f32 %s189, 0.0
    %v191 = vmul.f32 %v91, 0.26601171
    %192 = vrot.lane.b32.xlu0 %v91, 127
    %v193 = vpop.permute.xlu0 %192
    %194 = vrot.lane.b32.xlu0 %v91, 1
    %v195 = vpop.permute.xlu0 %194
    %v196 = vmul.f32 %v193, %v72
    %v197 = vadd.f32 %v191, %v196
    %v198 = vmul.f32 %v195, %v74
    %v199 = vadd.f32 %v197, %v198
    %200 = vrot.lane.b32.xlu0 %v91, 126
    %v201 = vpop.permute.xlu0 %200
    %202 = vrot.lane.b32.xlu0 %v91, 2
    %v203 = vpop.permute.xlu0 %202
    %v204 = vmul.f32 %v201, %v76
    %v205 = vadd.f32 %v199, %v204
    %v206 = vmul.f32 %v203, %v78
    %v207 = vadd.f32 %v205, %v206
    %208 = vrot.lane.b32.xlu0 %v91, 125
    %v209 = vpop.permute.xlu0 %208
    %210 = vrot.lane.b32.xlu0 %v91, 3
    %v211 = vpop.permute.xlu0 %210
    %v212 = vmul.f32 %v209, %v80
    %v213 = vadd.f32 %v207, %v212
    %v214 = vmul.f32 %v211, %v82
    %v215 = vadd.f32 %v213, %v214
    %216 = vrot.lane.b32.xlu0 %v91, 124
    %v217 = vpop.permute.xlu0 %216
    %218 = vrot.lane.b32.xlu0 %v91, 4
    %v219 = vpop.permute.xlu0 %218
    %v220 = vmul.f32 %v217, %v84
    %v221 = vadd.f32 %v215, %v220
    %v222 = vmul.f32 %v219, %v86
    %v223 = vadd.f32 %v221, %v222
    %224 = vrot.lane.b32.xlu0 %v91, 123
    %v225 = vpop.permute.xlu0 %224
    %226 = vrot.lane.b32.xlu0 %v91, 5
    %v227 = vpop.permute.xlu0 %226
    %v228 = vmul.f32 %v225, %v88
    %v229 = vadd.f32 %v223, %v228
    %v230 = vmul.f32 %v227, %v90
    %v231 = vadd.f32 %v229, %v230
    %v232 = vmul.f32 %v92, 0.26601171
    %233 = vrot.lane.b32.xlu0 %v92, 127
    %v234 = vpop.permute.xlu0 %233
    %235 = vrot.lane.b32.xlu0 %v92, 1
    %v236 = vpop.permute.xlu0 %235
    %v237 = vmul.f32 %v234, %v72
    %v238 = vadd.f32 %v232, %v237
    %v239 = vmul.f32 %v236, %v74
    %v240 = vadd.f32 %v238, %v239
    %241 = vrot.lane.b32.xlu0 %v92, 126
    %v242 = vpop.permute.xlu0 %241
    %243 = vrot.lane.b32.xlu0 %v92, 2
    %v244 = vpop.permute.xlu0 %243
    %v245 = vmul.f32 %v242, %v76
    %v246 = vadd.f32 %v240, %v245
    %v247 = vmul.f32 %v244, %v78
    %v248 = vadd.f32 %v246, %v247
    %249 = vrot.lane.b32.xlu0 %v92, 125
    %v250 = vpop.permute.xlu0 %249
    %251 = vrot.lane.b32.xlu0 %v92, 3
    %v252 = vpop.permute.xlu0 %251
    %v253 = vmul.f32 %v250, %v80
    %v254 = vadd.f32 %v248, %v253
    %v255 = vmul.f32 %v252, %v82
    %v256 = vadd.f32 %v254, %v255
    %257 = vrot.lane.b32.xlu0 %v92, 124
    %v258 = vpop.permute.xlu0 %257
    %259 = vrot.lane.b32.xlu0 %v92, 4
    %v260 = vpop.permute.xlu0 %259
    %v261 = vmul.f32 %v258, %v84
    %v262 = vadd.f32 %v256, %v261
    %v263 = vmul.f32 %v260, %v86
    %v264 = vadd.f32 %v262, %v263
    %265 = vrot.lane.b32.xlu0 %v92, 123
    %v266 = vpop.permute.xlu0 %265
    %267 = vrot.lane.b32.xlu0 %v92, 5
    %v268 = vpop.permute.xlu0 %267
    %v269 = vmul.f32 %v266, %v88
    %v270 = vadd.f32 %v264, %v269
    %v271 = vmul.f32 %v268, %v90
    %v272 = vadd.f32 %v270, %v271
    %v273 = vmul.f32 %v91, %v91
    %v274 = vmul.f32 %v273, 0.26601171
    %275 = vrot.lane.b32.xlu0 %v273, 127
    %v276 = vpop.permute.xlu0 %275
    %277 = vrot.lane.b32.xlu0 %v273, 1
    %v278 = vpop.permute.xlu0 %277
    %v279 = vmul.f32 %v276, %v72
    %v280 = vadd.f32 %v274, %v279
    %v281 = vmul.f32 %v278, %v74
    %v282 = vadd.f32 %v280, %v281
    %283 = vrot.lane.b32.xlu0 %v273, 126
    %v284 = vpop.permute.xlu0 %283
    %285 = vrot.lane.b32.xlu0 %v273, 2
    %v286 = vpop.permute.xlu0 %285
    %v287 = vmul.f32 %v284, %v76
    %v288 = vadd.f32 %v282, %v287
    %v289 = vmul.f32 %v286, %v78
    %v290 = vadd.f32 %v288, %v289
    %291 = vrot.lane.b32.xlu0 %v273, 125
    %v292 = vpop.permute.xlu0 %291
    %293 = vrot.lane.b32.xlu0 %v273, 3
    %v294 = vpop.permute.xlu0 %293
    %v295 = vmul.f32 %v292, %v80
    %v296 = vadd.f32 %v290, %v295
    %v297 = vmul.f32 %v294, %v82
    %v298 = vadd.f32 %v296, %v297
    %299 = vrot.lane.b32.xlu0 %v273, 124
    %v300 = vpop.permute.xlu0 %299
    %301 = vrot.lane.b32.xlu0 %v273, 4
    %v302 = vpop.permute.xlu0 %301
    %v303 = vmul.f32 %v300, %v84
    %v304 = vadd.f32 %v298, %v303
    %v305 = vmul.f32 %v302, %v86
    %v306 = vadd.f32 %v304, %v305
    %307 = vrot.lane.b32.xlu0 %v273, 123
    %v308 = vpop.permute.xlu0 %307
    %309 = vrot.lane.b32.xlu0 %v273, 5
    %v310 = vpop.permute.xlu0 %309
    %v311 = vmul.f32 %v308, %v88
    %v312 = vadd.f32 %v306, %v311
    %v313 = vmul.f32 %v310, %v90
    %v314 = vadd.f32 %v312, %v313
    %v315 = vmul.f32 %v92, %v92
    %v316 = vmul.f32 %v315, 0.26601171
    %317 = vrot.lane.b32.xlu0 %v315, 127
    %v318 = vpop.permute.xlu0 %317
    %319 = vrot.lane.b32.xlu0 %v315, 1
    %v320 = vpop.permute.xlu0 %319
    %v321 = vmul.f32 %v318, %v72
    %v322 = vadd.f32 %v316, %v321
    %v323 = vmul.f32 %v320, %v74
    %v324 = vadd.f32 %v322, %v323
    %325 = vrot.lane.b32.xlu0 %v315, 126
    %v326 = vpop.permute.xlu0 %325
    %327 = vrot.lane.b32.xlu0 %v315, 2
    %v328 = vpop.permute.xlu0 %327
    %v329 = vmul.f32 %v326, %v76
    %v330 = vadd.f32 %v324, %v329
    %v331 = vmul.f32 %v328, %v78
    %v332 = vadd.f32 %v330, %v331
    %333 = vrot.lane.b32.xlu0 %v315, 125
    %v334 = vpop.permute.xlu0 %333
    %335 = vrot.lane.b32.xlu0 %v315, 3
    %v336 = vpop.permute.xlu0 %335
    %v337 = vmul.f32 %v334, %v80
    %v338 = vadd.f32 %v332, %v337
    %v339 = vmul.f32 %v336, %v82
    %v340 = vadd.f32 %v338, %v339
    %341 = vrot.lane.b32.xlu0 %v315, 124
    %v342 = vpop.permute.xlu0 %341
    %343 = vrot.lane.b32.xlu0 %v315, 4
    %v344 = vpop.permute.xlu0 %343
    %v345 = vmul.f32 %v342, %v84
    %v346 = vadd.f32 %v340, %v345
    %v347 = vmul.f32 %v344, %v86
    %v348 = vadd.f32 %v346, %v347
    %349 = vrot.lane.b32.xlu0 %v315, 123
    %v350 = vpop.permute.xlu0 %349
    %351 = vrot.lane.b32.xlu0 %v315, 5
    %v352 = vpop.permute.xlu0 %351
    %v353 = vmul.f32 %v350, %v88
    %v354 = vadd.f32 %v348, %v353
    %v355 = vmul.f32 %v352, %v90
    %v356 = vadd.f32 %v354, %v355
    %v357 = vmul.f32 %v91, %v92
    %v358 = vmul.f32 %v357, 0.26601171
    %359 = vrot.lane.b32.xlu0 %v357, 127
    %v360 = vpop.permute.xlu0 %359
    %361 = vrot.lane.b32.xlu0 %v357, 1
    %v362 = vpop.permute.xlu0 %361
    %v363 = vmul.f32 %v360, %v72
    %v364 = vadd.f32 %v358, %v363
    %v365 = vmul.f32 %v362, %v74
    %v366 = vadd.f32 %v364, %v365
    %367 = vrot.lane.b32.xlu0 %v357, 126
    %v368 = vpop.permute.xlu0 %367
    %369 = vrot.lane.b32.xlu0 %v357, 2
    %v370 = vpop.permute.xlu0 %369
    %v371 = vmul.f32 %v368, %v76
    %v372 = vadd.f32 %v366, %v371
    %v373 = vmul.f32 %v370, %v78
    %v374 = vadd.f32 %v372, %v373
    %375 = vrot.lane.b32.xlu0 %v357, 125
    %v376 = vpop.permute.xlu0 %375
    %377 = vrot.lane.b32.xlu0 %v357, 3
    %v378 = vpop.permute.xlu0 %377
    %v379 = vmul.f32 %v376, %v80
    %v380 = vadd.f32 %v374, %v379
    %v381 = vmul.f32 %v378, %v82
    %v382 = vadd.f32 %v380, %v381
    %383 = vrot.lane.b32.xlu0 %v357, 124
    %v384 = vpop.permute.xlu0 %383
    %385 = vrot.lane.b32.xlu0 %v357, 4
    %v386 = vpop.permute.xlu0 %385
    %v387 = vmul.f32 %v384, %v84
    %v388 = vadd.f32 %v382, %v387
    %v389 = vmul.f32 %v386, %v86
    %v390 = vadd.f32 %v388, %v389
    %391 = vrot.lane.b32.xlu0 %v357, 123
    %v392 = vpop.permute.xlu0 %391
    %393 = vrot.lane.b32.xlu0 %v357, 5
    %v394 = vpop.permute.xlu0 %393
    %v395 = vmul.f32 %v392, %v88
    %v396 = vadd.f32 %v390, %v395
    %v397 = vmul.f32 %v394, %v90
    %v398 = vadd.f32 %v396, %v397
    %v399 = vmul.f32 %v231, %v231
    %v400 = vmul.f32 %v272, %v272
    %v401 = vmul.f32 %v231, %v272
    %v402 = vsub.f32 %v314, %v399
    %v403 = vsub.f32 %v356, %v400
    %v404 = vsub.f32 %v398, %v401
    %v405 = vmul.f32 %v401, 2.0
    %v406 = vadd.f32 %v405, 0.0001
    %v407 = vmul.f32 %v404, 2.0
    %v408 = vadd.f32 %v407, 0.0009
    %v409 = vmul.f32 %v406, %v408
    %v410 = vadd.f32 %v399, %v400
    %v411 = vadd.f32 %v410, 0.0001
    %v412 = vadd.f32 %v402, %v403
    %v413 = vadd.f32 %v412, 0.0009
    %v414 = vmul.f32 %v411, %v413
    %v415 = vrcp.pop %v414
    %v416 = vmul.f32 %v409, %v415
    %v417 = vsub.f32 1.0, %v416
    %v418 = vsel %vm96, %v417, 0.0
    %419 = vadd.xlane.f32.xlu0 %v418
    %v420 = vpop.xlane.xlu0 %419
    %v421 = vrot.slane %v420, 4
    %v422 = vadd.f32 %v420, %v421
    %v423 = vrot.slane %v422, 2
    %v424 = vadd.f32 %v422, %v423
    %v425 = vrot.slane %v424, 1
    %v426 = vadd.f32 %v424, %v425
    %s427 = vtos %v426
    %s428 = sadd.f32 %s427, 0.0
    %v429 = vmul.f32 %v93, %v67
    %v430 = vsel %vm96, %v429, 0.0
    %431 = vadd.xlane.f32.xlu0 %v430
    %v432 = vpop.xlane.xlu0 %431
    %v433 = vsel %vm96, %v432, 0.0
    %v434 = vrot.slane %v433, 4
    %v435 = vadd.f32 %v433, %v434
    %v436 = vrot.slane %v435, 2
    %v437 = vadd.f32 %v435, %v436
    %v438 = vrot.slane %v437, 1
    %v439 = vadd.f32 %v437, %v438
    %v440 = vadd.f32 %v439, %v68
    %v441 = vmul.f32 %v91, %v67
    %v442 = vsel %vm96, %v441, 0.0
    %443 = vadd.xlane.f32.xlu0 %v442
    %v444 = vpop.xlane.xlu0 %443
    %v445 = vsel %vm96, %v444, 0.0
    %v446 = vrot.slane %v445, 4
    %v447 = vadd.f32 %v445, %v446
    %v448 = vrot.slane %v447, 2
    %v449 = vadd.f32 %v447, %v448
    %v450 = vrot.slane %v449, 1
    %v451 = vadd.f32 %v449, %v450
    %v452 = vadd.f32 %v451, %v68
    %v453 = vsub.f32 0.0, %v440
    %v454 = vmax.f32 %v453, 0.0
    %v455 = vand.u32 2147483647, %v453
    %v456 = vsub.f32 0.0, %v455
    %v457 = vmul.f32 %v456, 1.442695
    %v458 = vpow.pop %v457
    %v459 = vadd.f32 %v458, 1.0
    %v460 = vlog2.pop %v459
    %v461 = vmul.f32 %v460, 0.6931472
    %v462 = vadd.f32 %v454, %v461
    %v463 = vadd.f32 %v462, 0.0
    %s464 = vtos %v463
    %s465 = sadd.f32 %s464, 0.0
    %v466 = vmax.f32 %v452, 0.0
    %v467 = vand.u32 2147483647, %v452
    %v468 = vsub.f32 0.0, %v467
    %v469 = vmul.f32 %v468, 1.442695
    %v470 = vpow.pop %v469
    %v471 = vadd.f32 %v470, 1.0
    %v472 = vlog2.pop %v471
    %v473 = vmul.f32 %v472, 0.6931472
    %v474 = vadd.f32 %v466, %v473
    %v475 = vadd.f32 %v474, 0.0
    %s476 = vtos %v475
    %s477 = sadd.f32 %s476, 0.0
    %s478 = scalar_lea.vmem [#allocation4], 4
    %v479 = vld [vmem:[%s478] sm:$0xf]
    %s480 = scalar_lea.vmem [#allocation7], 4
    %v481 = vld [vmem:[%s480] sm:$0xf]
    %s482 = scalar_lea.vmem %s2, 4
    %v483 = vld [vmem:[%s482] sm:$0xf]
    %v484 = vsub.f32 %v479, %v481
    %v485 = vmul.f32 %v484, %v484
    %v486 = vsel %vm96, %v485, 0.0
    %487 = vadd.xlane.f32.xlu0 %v486
    %v488 = vpop.xlane.xlu0 %487
    %v489 = vrot.slane %v488, 4
    %v490 = vadd.f32 %v488, %v489
    %v491 = vrot.slane %v490, 2
    %v492 = vadd.f32 %v490, %v491
    %v493 = vrot.slane %v492, 1
    %v494 = vadd.f32 %v492, %v493
    %s495 = vtos %v494
    %s496 = sadd.f32 %s107, %s495
    %v497 = vsel %vm96, %v479, 0.0
    %v498 = vrot.slane %v497, 4
    %v499 = vadd.f32 %v497, %v498
    %v500 = vrot.slane %v499, 2
    %v501 = vadd.f32 %v499, %v500
    %v502 = vrot.slane %v501, 1
    %v503 = vadd.f32 %v501, %v502
    %v504 = vmul.f32 %v503, %v115
    %v505 = vsub.f32 %v479, %v504
    %v506 = vsel %vm96, %v481, 0.0
    %v507 = vrot.slane %v506, 4
    %v508 = vadd.f32 %v506, %v507
    %v509 = vrot.slane %v508, 2
    %v510 = vadd.f32 %v508, %v509
    %v511 = vrot.slane %v510, 1
    %v512 = vadd.f32 %v510, %v511
    %v513 = vmul.f32 %v512, %v115
    %v514 = vsub.f32 %v481, %v513
    %v515 = vmul.f32 %v505, %v505
    %v516 = vsel %vm96, %v515, 0.0
    %v517 = vrot.slane %v516, 4
    %v518 = vadd.f32 %v516, %v517
    %v519 = vrot.slane %v518, 2
    %v520 = vadd.f32 %v518, %v519
    %v521 = vrot.slane %v520, 1
    %v522 = vadd.f32 %v520, %v521
    %v523 = vmax.f32 %v522, 1e-08
    %v524 = vmul.f32 %v514, %v514
    %v525 = vsel %vm96, %v524, 0.0
    %v526 = vrot.slane %v525, 4
    %v527 = vadd.f32 %v525, %v526
    %v528 = vrot.slane %v527, 2
    %v529 = vadd.f32 %v527, %v528
    %v530 = vrot.slane %v529, 1
    %v531 = vadd.f32 %v529, %v530
    %v532 = vmax.f32 %v531, 1e-08
    %v533 = vmul.f32 %v505, %v514
    %v534 = vsel %vm96, %v533, 0.0
    %v535 = vrot.slane %v534, 4
    %v536 = vadd.f32 %v534, %v535
    %v537 = vrot.slane %v536, 2
    %v538 = vadd.f32 %v536, %v537
    %v539 = vrot.slane %v538, 1
    %v540 = vadd.f32 %v538, %v539
    %v541 = vmul.f32 %v523, %v532
    %v542 = vrsqrt.pop %v541
    %v543 = vmul.f32 %v540, %v542
    %v544 = vmax.f32 %v543, -1.0
    %v545 = vmin.f32 %v544, 1.0
    %v546 = vsub.f32 1.0, %v545
    %v547 = vsel %vm159, %v546, 0.0
    %548 = vadd.xlane.f32.xlu0 %v547
    %v549 = vpop.xlane.xlu0 %548
    %v550 = vrot.slane %v549, 4
    %v551 = vadd.f32 %v549, %v550
    %v552 = vrot.slane %v551, 2
    %v553 = vadd.f32 %v551, %v552
    %v554 = vrot.slane %v553, 1
    %v555 = vadd.f32 %v553, %v554
    %s556 = vtos %v555
    %s557 = sadd.f32 %s170, %s556
    %v559 = vrot.slane %v484, 7
    %v561 = vsub.f32 %v484, %v559
    %v562 = vmul.f32 %v561, %v561
    %v564 = vrot.slane %v562, 1
    %v566 = vsel %vm179, %v564, 0.0
    %567 = vadd.xlane.f32.xlu0 %v566
    %v568 = vpop.xlane.xlu0 %567
    %v569 = vrot.slane %v568, 4
    %v570 = vadd.f32 %v568, %v569
    %v571 = vrot.slane %v570, 2
    %v572 = vadd.f32 %v570, %v571
    %v573 = vrot.slane %v572, 1
    %v574 = vadd.f32 %v572, %v573
    %s575 = vtos %v574
    %s576 = sadd.f32 %s190, %s575
    %v577 = vmul.f32 %v479, 0.26601171
    %578 = vrot.lane.b32.xlu0 %v479, 127
    %v579 = vpop.permute.xlu0 %578
    %580 = vrot.lane.b32.xlu0 %v479, 1
    %v581 = vpop.permute.xlu0 %580
    %v582 = vmul.f32 %v579, %v72
    %v583 = vadd.f32 %v577, %v582
    %v584 = vmul.f32 %v581, %v74
    %v585 = vadd.f32 %v583, %v584
    %586 = vrot.lane.b32.xlu0 %v479, 126
    %v587 = vpop.permute.xlu0 %586
    %588 = vrot.lane.b32.xlu0 %v479, 2
    %v589 = vpop.permute.xlu0 %588
    %v590 = vmul.f32 %v587, %v76
    %v591 = vadd.f32 %v585, %v590
    %v592 = vmul.f32 %v589, %v78
    %v593 = vadd.f32 %v591, %v592
    %594 = vrot.lane.b32.xlu0 %v479, 125
    %v595 = vpop.permute.xlu0 %594
    %596 = vrot.lane.b32.xlu0 %v479, 3
    %v597 = vpop.permute.xlu0 %596
    %v598 = vmul.f32 %v595, %v80
    %v599 = vadd.f32 %v593, %v598
    %v600 = vmul.f32 %v597, %v82
    %v601 = vadd.f32 %v599, %v600
    %602 = vrot.lane.b32.xlu0 %v479, 124
    %v603 = vpop.permute.xlu0 %602
    %604 = vrot.lane.b32.xlu0 %v479, 4
    %v605 = vpop.permute.xlu0 %604
    %v606 = vmul.f32 %v603, %v84
    %v607 = vadd.f32 %v601, %v606
    %v608 = vmul.f32 %v605, %v86
    %v609 = vadd.f32 %v607, %v608
    %610 = vrot.lane.b32.xlu0 %v479, 123
    %v611 = vpop.permute.xlu0 %610
    %612 = vrot.lane.b32.xlu0 %v479, 5
    %v613 = vpop.permute.xlu0 %612
    %v614 = vmul.f32 %v611, %v88
    %v615 = vadd.f32 %v609, %v614
    %v616 = vmul.f32 %v613, %v90
    %v617 = vadd.f32 %v615, %v616
    %v618 = vmul.f32 %v481, 0.26601171
    %619 = vrot.lane.b32.xlu0 %v481, 127
    %v620 = vpop.permute.xlu0 %619
    %621 = vrot.lane.b32.xlu0 %v481, 1
    %v622 = vpop.permute.xlu0 %621
    %v623 = vmul.f32 %v620, %v72
    %v624 = vadd.f32 %v618, %v623
    %v625 = vmul.f32 %v622, %v74
    %v626 = vadd.f32 %v624, %v625
    %627 = vrot.lane.b32.xlu0 %v481, 126
    %v628 = vpop.permute.xlu0 %627
    %629 = vrot.lane.b32.xlu0 %v481, 2
    %v630 = vpop.permute.xlu0 %629
    %v631 = vmul.f32 %v628, %v76
    %v632 = vadd.f32 %v626, %v631
    %v633 = vmul.f32 %v630, %v78
    %v634 = vadd.f32 %v632, %v633
    %635 = vrot.lane.b32.xlu0 %v481, 125
    %v636 = vpop.permute.xlu0 %635
    %637 = vrot.lane.b32.xlu0 %v481, 3
    %v638 = vpop.permute.xlu0 %637
    %v639 = vmul.f32 %v636, %v80
    %v640 = vadd.f32 %v634, %v639
    %v641 = vmul.f32 %v638, %v82
    %v642 = vadd.f32 %v640, %v641
    %643 = vrot.lane.b32.xlu0 %v481, 124
    %v644 = vpop.permute.xlu0 %643
    %645 = vrot.lane.b32.xlu0 %v481, 4
    %v646 = vpop.permute.xlu0 %645
    %v647 = vmul.f32 %v644, %v84
    %v648 = vadd.f32 %v642, %v647
    %v649 = vmul.f32 %v646, %v86
    %v650 = vadd.f32 %v648, %v649
    %651 = vrot.lane.b32.xlu0 %v481, 123
    %v652 = vpop.permute.xlu0 %651
    %653 = vrot.lane.b32.xlu0 %v481, 5
    %v654 = vpop.permute.xlu0 %653
    %v655 = vmul.f32 %v652, %v88
    %v656 = vadd.f32 %v650, %v655
    %v657 = vmul.f32 %v654, %v90
    %v658 = vadd.f32 %v656, %v657
    %v659 = vmul.f32 %v479, %v479
    %v660 = vmul.f32 %v659, 0.26601171
    %661 = vrot.lane.b32.xlu0 %v659, 127
    %v662 = vpop.permute.xlu0 %661
    %663 = vrot.lane.b32.xlu0 %v659, 1
    %v664 = vpop.permute.xlu0 %663
    %v665 = vmul.f32 %v662, %v72
    %v666 = vadd.f32 %v660, %v665
    %v667 = vmul.f32 %v664, %v74
    %v668 = vadd.f32 %v666, %v667
    %669 = vrot.lane.b32.xlu0 %v659, 126
    %v670 = vpop.permute.xlu0 %669
    %671 = vrot.lane.b32.xlu0 %v659, 2
    %v672 = vpop.permute.xlu0 %671
    %v673 = vmul.f32 %v670, %v76
    %v674 = vadd.f32 %v668, %v673
    %v675 = vmul.f32 %v672, %v78
    %v676 = vadd.f32 %v674, %v675
    %677 = vrot.lane.b32.xlu0 %v659, 125
    %v678 = vpop.permute.xlu0 %677
    %679 = vrot.lane.b32.xlu0 %v659, 3
    %v680 = vpop.permute.xlu0 %679
    %v681 = vmul.f32 %v678, %v80
    %v682 = vadd.f32 %v676, %v681
    %v683 = vmul.f32 %v680, %v82
    %v684 = vadd.f32 %v682, %v683
    %685 = vrot.lane.b32.xlu0 %v659, 124
    %v686 = vpop.permute.xlu0 %685
    %687 = vrot.lane.b32.xlu0 %v659, 4
    %v688 = vpop.permute.xlu0 %687
    %v689 = vmul.f32 %v686, %v84
    %v690 = vadd.f32 %v684, %v689
    %v691 = vmul.f32 %v688, %v86
    %v692 = vadd.f32 %v690, %v691
    %693 = vrot.lane.b32.xlu0 %v659, 123
    %v694 = vpop.permute.xlu0 %693
    %695 = vrot.lane.b32.xlu0 %v659, 5
    %v696 = vpop.permute.xlu0 %695
    %v697 = vmul.f32 %v694, %v88
    %v698 = vadd.f32 %v692, %v697
    %v699 = vmul.f32 %v696, %v90
    %v700 = vadd.f32 %v698, %v699
    %v701 = vmul.f32 %v481, %v481
    %v702 = vmul.f32 %v701, 0.26601171
    %703 = vrot.lane.b32.xlu0 %v701, 127
    %v704 = vpop.permute.xlu0 %703
    %705 = vrot.lane.b32.xlu0 %v701, 1
    %v706 = vpop.permute.xlu0 %705
    %v707 = vmul.f32 %v704, %v72
    %v708 = vadd.f32 %v702, %v707
    %v709 = vmul.f32 %v706, %v74
    %v710 = vadd.f32 %v708, %v709
    %711 = vrot.lane.b32.xlu0 %v701, 126
    %v712 = vpop.permute.xlu0 %711
    %713 = vrot.lane.b32.xlu0 %v701, 2
    %v714 = vpop.permute.xlu0 %713
    %v715 = vmul.f32 %v712, %v76
    %v716 = vadd.f32 %v710, %v715
    %v717 = vmul.f32 %v714, %v78
    %v718 = vadd.f32 %v716, %v717
    %719 = vrot.lane.b32.xlu0 %v701, 125
    %v720 = vpop.permute.xlu0 %719
    %721 = vrot.lane.b32.xlu0 %v701, 3
    %v722 = vpop.permute.xlu0 %721
    %v723 = vmul.f32 %v720, %v80
    %v724 = vadd.f32 %v718, %v723
    %v725 = vmul.f32 %v722, %v82
    %v726 = vadd.f32 %v724, %v725
    %727 = vrot.lane.b32.xlu0 %v701, 124
    %v728 = vpop.permute.xlu0 %727
    %729 = vrot.lane.b32.xlu0 %v701, 4
    %v730 = vpop.permute.xlu0 %729
    %v731 = vmul.f32 %v728, %v84
    %v732 = vadd.f32 %v726, %v731
    %v733 = vmul.f32 %v730, %v86
    %v734 = vadd.f32 %v732, %v733
    %735 = vrot.lane.b32.xlu0 %v701, 123
    %v736 = vpop.permute.xlu0 %735
    %737 = vrot.lane.b32.xlu0 %v701, 5
    %v738 = vpop.permute.xlu0 %737
    %v739 = vmul.f32 %v736, %v88
    %v740 = vadd.f32 %v734, %v739
    %v741 = vmul.f32 %v738, %v90
    %v742 = vadd.f32 %v740, %v741
    %v743 = vmul.f32 %v479, %v481
    %v744 = vmul.f32 %v743, 0.26601171
    %745 = vrot.lane.b32.xlu0 %v743, 127
    %v746 = vpop.permute.xlu0 %745
    %747 = vrot.lane.b32.xlu0 %v743, 1
    %v748 = vpop.permute.xlu0 %747
    %v749 = vmul.f32 %v746, %v72
    %v750 = vadd.f32 %v744, %v749
    %v751 = vmul.f32 %v748, %v74
    %v752 = vadd.f32 %v750, %v751
    %753 = vrot.lane.b32.xlu0 %v743, 126
    %v754 = vpop.permute.xlu0 %753
    %755 = vrot.lane.b32.xlu0 %v743, 2
    %v756 = vpop.permute.xlu0 %755
    %v757 = vmul.f32 %v754, %v76
    %v758 = vadd.f32 %v752, %v757
    %v759 = vmul.f32 %v756, %v78
    %v760 = vadd.f32 %v758, %v759
    %761 = vrot.lane.b32.xlu0 %v743, 125
    %v762 = vpop.permute.xlu0 %761
    %763 = vrot.lane.b32.xlu0 %v743, 3
    %v764 = vpop.permute.xlu0 %763
    %v765 = vmul.f32 %v762, %v80
    %v766 = vadd.f32 %v760, %v765
    %v767 = vmul.f32 %v764, %v82
    %v768 = vadd.f32 %v766, %v767
    %769 = vrot.lane.b32.xlu0 %v743, 124
    %v770 = vpop.permute.xlu0 %769
    %771 = vrot.lane.b32.xlu0 %v743, 4
    %v772 = vpop.permute.xlu0 %771
    %v773 = vmul.f32 %v770, %v84
    %v774 = vadd.f32 %v768, %v773
    %v775 = vmul.f32 %v772, %v86
    %v776 = vadd.f32 %v774, %v775
    %777 = vrot.lane.b32.xlu0 %v743, 123
    %v778 = vpop.permute.xlu0 %777
    %779 = vrot.lane.b32.xlu0 %v743, 5
    %v780 = vpop.permute.xlu0 %779
    %v781 = vmul.f32 %v778, %v88
    %v782 = vadd.f32 %v776, %v781
    %v783 = vmul.f32 %v780, %v90
    %v784 = vadd.f32 %v782, %v783
    %v785 = vmul.f32 %v617, %v617
    %v786 = vmul.f32 %v658, %v658
    %v787 = vmul.f32 %v617, %v658
    %v788 = vsub.f32 %v700, %v785
    %v789 = vsub.f32 %v742, %v786
    %v790 = vsub.f32 %v784, %v787
    %v791 = vmul.f32 %v787, 2.0
    %v792 = vadd.f32 %v791, 0.0001
    %v793 = vmul.f32 %v790, 2.0
    %v794 = vadd.f32 %v793, 0.0009
    %v795 = vmul.f32 %v792, %v794
    %v796 = vadd.f32 %v785, %v786
    %v797 = vadd.f32 %v796, 0.0001
    %v798 = vadd.f32 %v788, %v789
    %v799 = vadd.f32 %v798, 0.0009
    %v800 = vmul.f32 %v797, %v799
    %v801 = vrcp.pop %v800
    %v802 = vmul.f32 %v795, %v801
    %v803 = vsub.f32 1.0, %v802
    %v804 = vsel %vm96, %v803, 0.0
    %805 = vadd.xlane.f32.xlu0 %v804
    %v806 = vpop.xlane.xlu0 %805
    %v807 = vrot.slane %v806, 4
    %v808 = vadd.f32 %v806, %v807
    %v809 = vrot.slane %v808, 2
    %v810 = vadd.f32 %v808, %v809
    %v811 = vrot.slane %v810, 1
    %v812 = vadd.f32 %v810, %v811
    %s813 = vtos %v812
    %s814 = sadd.f32 %s428, %s813
    %v815 = vmul.f32 %v483, %v67
    %v816 = vsel %vm96, %v815, 0.0
    %817 = vadd.xlane.f32.xlu0 %v816
    %v818 = vpop.xlane.xlu0 %817
    %v819 = vsel %vm96, %v818, 0.0
    %v820 = vrot.slane %v819, 4
    %v821 = vadd.f32 %v819, %v820
    %v822 = vrot.slane %v821, 2
    %v823 = vadd.f32 %v821, %v822
    %v824 = vrot.slane %v823, 1
    %v825 = vadd.f32 %v823, %v824
    %v826 = vadd.f32 %v825, %v68
    %v827 = vmul.f32 %v479, %v67
    %v828 = vsel %vm96, %v827, 0.0
    %829 = vadd.xlane.f32.xlu0 %v828
    %v830 = vpop.xlane.xlu0 %829
    %v831 = vsel %vm96, %v830, 0.0
    %v832 = vrot.slane %v831, 4
    %v833 = vadd.f32 %v831, %v832
    %v834 = vrot.slane %v833, 2
    %v835 = vadd.f32 %v833, %v834
    %v836 = vrot.slane %v835, 1
    %v837 = vadd.f32 %v835, %v836
    %v838 = vadd.f32 %v837, %v68
    %v839 = vsub.f32 0.0, %v826
    %v840 = vmax.f32 %v839, 0.0
    %v841 = vand.u32 2147483647, %v839
    %v842 = vsub.f32 0.0, %v841
    %v843 = vmul.f32 %v842, 1.442695
    %v844 = vpow.pop %v843
    %v845 = vadd.f32 %v844, 1.0
    %v846 = vlog2.pop %v845
    %v847 = vmul.f32 %v846, 0.6931472
    %v848 = vadd.f32 %v840, %v847
    %v849 = vadd.f32 %v848, 0.0
    %s850 = vtos %v849
    %s851 = sadd.f32 %s465, %s850
    %v852 = vmax.f32 %v838, 0.0
    %v853 = vand.u32 2147483647, %v838
    %v854 = vsub.f32 0.0, %v853
    %v855 = vmul.f32 %v854, 1.442695
    %v856 = vpow.pop %v855
    %v857 = vadd.f32 %v856, 1.0
    %v858 = vlog2.pop %v857
    %v859 = vmul.f32 %v858, 0.6931472
    %v860 = vadd.f32 %v852, %v859
    %v861 = vadd.f32 %v860, 0.0
    %s862 = vtos %v861
    %s863 = sadd.f32 %s477, %s862
    %s864 = sld [smem:[#allocation2]]
    %s865 = sadd.f32 %s864, %s496
    %s866 = scalar_lea.smem [#allocation2], 0
    %867 = sst [smem:[%s866]] %s865
    %s868 = sld [smem:[#allocation2 + $0x1]]
    %s869 = sadd.f32 %s868, %s557
    %s870 = scalar_lea.smem [#allocation2], 1
    %871 = sst [smem:[%s870]] %s869
    %s872 = sld [smem:[#allocation2 + $0x2]]
    %s873 = sadd.f32 %s872, %s576
    %s874 = scalar_lea.smem [#allocation2], 2
    %875 = sst [smem:[%s874]] %s873
    %s876 = sld [smem:[#allocation2 + $0x3]]
    %s877 = sadd.f32 %s876, %s814
    %s878 = scalar_lea.smem [#allocation2], 3
    %879 = sst [smem:[%s878]] %s877
    %s880 = sld [smem:[#allocation2 + $0x4]]
    %s881 = sadd.f32 %s880, %s851
    %s882 = scalar_lea.smem [#allocation2], 4
    %883 = sst [smem:[%s882]] %s881
    %s884 = sld [smem:[#allocation2 + $0x5]]
    %s885 = sadd.f32 %s884, %s863
    %s886 = scalar_lea.smem [#allocation2], 5
    %887 = sst [smem:[%s886]] %s885
    // Predicated region
    $region34: #{tpu_custom_call.1} parent=1 // pred_check
      %p888 = pneg %p51
    $region35: #{tpu_custom_call.1} parent=1 // pred_check_branch
      %890 = sbr.rel (%p888) target = $region37
    $region36: #{tpu_custom_call.1} parent=1 // pred_region
      %s891 = sld [smem:[#allocation2]]
      %s892 = smul.f32 %s891, 0.0009765625
      %s893 = sld [smem:[#allocation2 + $0x1]]
      %s894 = smul.f32 %s893, 0.00390625
      %s895 = sld [smem:[#allocation2 + $0x2]]
      %s896 = smul.f32 %s895, 0.0013020834
      %s897 = sld [smem:[#allocation2 + $0x3]]
      %s898 = smul.f32 %s897, 0.0009765625
      %s899 = sld [smem:[#allocation2 + $0x4]]
      %s900 = sld [smem:[#allocation2 + $0x5]]
      %s901 = sadd.f32 %s899, %s900
      %s902 = smul.f32 %s901, 0.5
      %s903 = smul.f32 %s892, 0.1
      %s904 = smul.f32 %s894, 0.1
      %s905 = sadd.f32 %s903, %s904
      %s906 = smul.f32 %s896, 0.1
      %s907 = sadd.f32 %s905, %s906
      %s908 = smul.f32 %s898, 0.35
      %s909 = sadd.f32 %s907, %s908
      %s910 = smul.f32 %s902, 0.35
      %s911 = sadd.f32 %s909, %s910
      %s912 = scalar_lea.smem [#allocation9], 0
      %913 = sst [smem:[%s912]] %s911
      %s914 = scalar_lea.smem [#allocation9], 1
      %915 = sst [smem:[%s914]] %s892
      %s916 = scalar_lea.smem [#allocation9], 2
      %917 = sst [smem:[%s916]] %s894
      %s918 = scalar_lea.smem [#allocation9], 3
      %919 = sst [smem:[%s918]] %s896
      %s920 = scalar_lea.smem [#allocation9], 4
      %921 = sst [smem:[%s920]] %s898
      %s922 = scalar_lea.smem [#allocation9], 5
      %923 = sst [smem:[%s922]] %s902
    $region37: #{tpu_custom_call.1} parent=1 // pred_fallthru
      _
    // Predicated region
    $region38: #{tpu_custom_call.1} parent=1 // pred_check
      _
    $region39: #{tpu_custom_call.1} parent=1 // pred_check_branch
      %925 = sbr.rel (0) target = $region41
    $region40: #{tpu_custom_call.1} parent=1 // pred_region
      %s927 = ssub.s32 16, 16
      %928 = vsyncadd [#allocation6], %s927
      %931 = dma.smem_to_hbm [#allocation9], 16, %s5, [#allocation6]
    $region41: #{tpu_custom_call.1} parent=1 // pred_fallthru
      _
    // Predicated region
    $region42: #{tpu_custom_call.1} parent=1 // pred_check
      _
    $region43: #{tpu_custom_call.1} parent=1 // pred_check_branch
      %933 = sbr.rel (0) target = $region45
    $region44: #{tpu_custom_call.1} parent=1 // pred_region
      %934 = dma.done [#allocation6], 16
    $region45: #{tpu_custom_call.1} parent=1 // pred_fallthru
      _
    %935 = sfence
    %936 = vsyncpa [#allocation5], 1
    %937 = vsyncpa [#allocation8], 1
    %938 = vsyncpa [#allocation6], 1

</llo_original>
